<compile_context>
chip_gen: v7x
topology: tpu7x:2x2x1
jax: 0.10.0
libtpu: 0.0.40
codegen_flags: <defaults>
</compile_context>

<pallas_src>
import math
import jax
import jax.numpy as jnp
from jax import lax
from jax.experimental import pallas as pl
from jax.experimental.pallas import tpu as pltpu


def make_rwkv_kernel(Bb, T, C, d_attn, n_head, out_dim, depth):
    hs = d_attn // n_head
    center = T // 2
    R = Bb * T  # rows fed to the wide projections

    def kernel(x_ref, wqkv_ref, bqkv_ref, wf_ref, bf_ref, o_ref, c_ref, ctx_ref):
        x = x_ref[...].reshape(R, C)  # (Bb*T, C), f32 carry across depth

        # NOTE: depth/n_head are tiny here; if they are scaled up, convert these
        # static Python unrolls to lax.fori_loop(..., unroll=True) to keep vreg
        # pressure flat.
        for d in range(depth):
            # Record pre-step center tokens, lane-dense into (Bb, 1, depth*C).
            centers = x.reshape(Bb, T, C)[:, center, :]            # (Bb, C)
            c_ref[:, :, d * C:(d + 1) * C] = centers.reshape(Bb, 1, C)

            # One wide QKV projection for all batch rows & heads (MXU-friendly).
            # Scale 1/sqrt(hs) is already folded into the Q columns.
            qkv = (jnp.dot(x.astype(jnp.bfloat16), wqkv_ref[...],
                           preferred_element_type=jnp.float32)
                   + bqkv_ref[...])                                # (R, 3*d_attn) f32

            # Per (batch, head) tiny attention on (T, T) tiles; write ctx into
            # a VMEM scratch at its final head/row offsets (no concat needed).
            for b in range(Bb):
                r0 = b * T
                for h in range(n_head):
                    c0 = h * hs
                    q = qkv[r0:r0 + T, c0:c0 + hs]
                    k = qkv[r0:r0 + T, d_attn + c0:d_attn + c0 + hs]
                    v = qkv[r0:r0 + T, 2 * d_attn + c0:2 * d_attn + c0 + hs]
                    # scores = q @ k^T (contract last dims, no explicit transpose)
                    s = lax.dot_general(q, k, (((1,), (1,)), ((), ())),
                                        preferred_element_type=jnp.float32)
                    # mask is all-ones in RWKV.forward -> no masking needed.
                    s = s - jnp.max(s, axis=-1, keepdims=True)
                    p = jnp.exp(s)
                    p = p * pl.reciprocal(jnp.sum(p, axis=-1, keepdims=True),
                                          approx=True)
                    ctx_ref[r0:r0 + T, c0:c0 + hs] = jnp.dot(
                        p, v, preferred_element_type=jnp.float32)

            # Fused out+adjust_dim projection: one wide matmul over all rows/heads.
            x = (jnp.dot(ctx_ref[...].astype(jnp.bfloat16), wf_ref[...],
                         preferred_element_type=jnp.float32)
                 + bf_ref[...])                                    # (R, out_dim)

        o_ref[...] = x.reshape(Bb, T, out_dim)

    return kernel


def pack_weights(wqkv, bqkv, wout, bout, wadj, badj, d_attn, n_head):
    """Host-side weight prep: scale folding, out/adjust fusion, bf16 cast."""
    hs = d_attn // n_head
    scale = 1.0 / math.sqrt(hs)
    # Fold 1/sqrt(head_size) into the Q columns of the qkv projection.
    col_scale = jnp.concatenate([jnp.full((d_attn,), scale, jnp.float32),
                                 jnp.ones((2 * d_attn,), jnp.float32)])
    wqkv_s = (wqkv * col_scale[None, :]).astype(jnp.bfloat16)   # (C, 3*d_attn)
    bqkv_s = (bqkv * col_scale[None, :]).astype(jnp.float32)    # (1, 3*d_attn)
    # (ctx @ wout + bout) @ wadj + badj == ctx @ (wout@wadj) + (bout@wadj + badj)
    wf = (wout @ wadj).astype(jnp.bfloat16)                     # (d_attn, out_dim)
    bf = (bout @ wadj + badj).astype(jnp.float32)               # (1, out_dim)
    return wqkv_s, bqkv_s, wf, bf


def rwkv_pallas(x, packed, depth, d_attn, n_head, num_blocks=None):
    B, T, C = x.shape
    wqkv, bqkv, wf, bf = packed
    out_dim = wf.shape[-1]
    assert depth == 1 or out_dim == C, "depth>1 requires out_dim == input C"

    if num_blocks is None:
        # v7x has 2 TensorCores/chip: give each a block when B allows it.
        # On 1-TC v5e/v6e the extra grid step costs ~0.35 us -- negligible.
        num_blocks = 2 if (B % 2 == 0 and B >= 2) else 1
    assert B % num_blocks == 0
    Bb = B // num_blocks

    kernel = make_rwkv_kernel(Bb, T, C, d_attn, n_head, out_dim, depth)

    y, centers = pl.pallas_call(
        kernel,
        out_shape=(jax.ShapeDtypeStruct((B, T, out_dim), jnp.float32),
                   jax.ShapeDtypeStruct((B, 1, depth * C), jnp.float32)),
        grid=(num_blocks,),
        in_specs=[
            pl.BlockSpec((Bb, T, C), lambda g: (g, 0, 0)),
            pl.BlockSpec(wqkv.shape, lambda g: (0, 0)),
            pl.BlockSpec(bqkv.shape, lambda g: (0, 0)),
            pl.BlockSpec(wf.shape, lambda g: (0, 0)),
            pl.BlockSpec(bf.shape, lambda g: (0, 0)),
        ],
        out_specs=(pl.BlockSpec((Bb, T, out_dim), lambda g: (g, 0, 0)),
                   pl.BlockSpec((Bb, 1, depth * C), lambda g: (g, 0, 0))),
        scratch_shapes=[pltpu.VMEM((Bb * T, d_attn), jnp.float32)],
        compiler_params=pltpu.CompilerParams(
            dimension_semantics=("parallel",)),
    )(x, wqkv, bqkv, wf, bf)

    return y, centers.reshape(B, depth, C)


def rwkv_forward(x, packed, depth, d_attn, n_head):
    """Mirrors RWKV.forward: depth iterations of the shared tiny attention."""
    y, centers = rwkv_pallas(x, packed, depth, d_attn, n_head)
    x_center_attention = [centers[:, d, :] for d in range(depth)]
    x_center_mlp = [centers[:, d, :] for d in range(depth)]
    return y, x_center_attention, x_center_mlp


def _linear_params(key, fan_in, fan_out):
    """Deterministic init matching nn.Linear's uniform(-1/sqrt(fan_in), ...)."""
    kw, kb = jax.random.split(key)
    bound = 1.0 / math.sqrt(fan_in)
    w_t = jax.random.uniform(kw, (fan_in, fan_out), jnp.float32, -bound, bound)
    b = jax.random.uniform(kb, (1, fan_out), jnp.float32, -bound, bound)
    return w_t, b


def _reference(x, weights, d_attn, n_head):
    """Pure-JAX reference of RWKV_TinyAttn (unfused, f32) for correctness."""
    wqkv, bqkv, wout, bout, wadj, badj = weights
    B, T, C = x.shape
    hs = d_attn // n_head
    qkv = x @ wqkv + bqkv
    q, k, v = jnp.split(qkv, 3, axis=-1)
    q = q.reshape(B, T, n_head, hs).transpose(0, 2, 1, 3)
    k = k.reshape(B, T, n_head, hs).transpose(0, 2, 1, 3)
    v = v.reshape(B, T, n_head, hs).transpose(0, 2, 1, 3)
    s = jnp.einsum('bhqd,bhkd->bhqk', q, k) / math.sqrt(hs)
    p = jax.nn.softmax(s, axis=-1)
    ctx = jnp.einsum('bhqk,bhkd->bhqd', p, v).transpose(0, 2, 1, 3)
    ctx = ctx.reshape(B, T, d_attn)
    out = ctx @ wout + bout
    return out @ wadj + badj


if __name__ == "__main__":
    # Small but self-consistent shapes:
    #   n_embd = 128 so adjust_dim output (64) matches n_embd // 2, which is
    #   what the shared qkv Linear expects -- required for depth > 1.
    B, T = 2, 8
    n_embd = 128
    C = n_embd // 2          # 64 : input feature dim = n_embd // 2
    d_attn = 64              # params['net']['rwkv_tiny_attn']
    n_head = 2               # params['net']['rwkv_tiny_head']
    depth = 2

    key = jax.random.PRNGKey(0)
    kx, k1, k2, k3 = jax.random.split(key, 4)

    x = jax.random.normal(kx, (B, T, C), jnp.float32)

    wqkv, bqkv = _linear_params(k1, C, 3 * d_attn)    # qkv : C -> 3*d_attn
    wout, bout = _linear_params(k2, d_attn, n_embd)   # out : d_attn -> n_embd
    wadj, badj = _linear_params(k3, n_embd, 64)       # adjust_dim : n_embd -> 64
    raw_weights = (wqkv, bqkv, wout, bout, wadj, badj)
    packed = pack_weights(wqkv, bqkv, wout, bout, wadj, badj, d_attn, n_head)

    y, x_center_attn, x_center_mlp = rwkv_forward(x, packed, depth, d_attn, n_head)
    y = jax.block_until_ready(y)

    # Pure-JAX reference of the same forward pass (unfused f32 weights).
    x_ref = x
    ref_centers = []
    for _ in range(depth):
        ref_centers.append(x_ref[:, T // 2, :])
        x_ref = _reference(x_ref, raw_weights, d_attn, n_head)

    assert y.shape == (B, T, 64)
    assert len(x_center_attn) == depth and len(x_center_mlp) == depth
    assert all(c.shape == (B, C) for c in x_center_attn)
    assert jnp.allclose(y, x_ref, rtol=5e-2, atol=5e-2)
    for d in range(depth):
        assert jnp.allclose(x_center_attn[d], ref_centers[d], rtol=5e-2, atol=5e-2)
        assert jnp.allclose(x_center_mlp[d], ref_centers[d], rtol=5e-2, atol=5e-2)

    print("KERNEL_OK")
</pallas_src>

<mosaic_0001>
module attributes {stable_mosaic.version = 11 : i64} {
  func.func @kernel(%arg0: i32, %arg1: memref<1x8x64xf32, #tpu.memory_space<vmem>>, %arg2: memref<64x192xbf16, #tpu.memory_space<vmem>>, %arg3: memref<1x192xf32, #tpu.memory_space<vmem>>, %arg4: memref<64x64xbf16, #tpu.memory_space<vmem>>, %arg5: memref<1x64xf32, #tpu.memory_space<vmem>>, %arg6: memref<1x8x64xf32, #tpu.memory_space<vmem>>, %arg7: memref<1x1x128xf32, #tpu.memory_space<vmem>>, %arg8: memref<8x64xf32, #tpu.memory_space<vmem>>) attributes {dimension_semantics = [#tpu.dimension_semantics<parallel>], iteration_bounds = array<i64: 2>, scalar_prefetch = 0 : i64, scratch_operands = 1 : i64, tpu.core_type = #tpu.core_type<tc>, window_params = [{transform_indices = @transform_0, window_bounds = array<i64: 1, 8, 64>}, {pipeline_mode = #tpu.pipeline_mode<synchronous>, transform_indices = @transform_1, window_bounds = array<i64: 64, 192>}, {pipeline_mode = #tpu.pipeline_mode<synchronous>, transform_indices = @transform_2, window_bounds = array<i64: 1, 192>}, {pipeline_mode = #tpu.pipeline_mode<synchronous>, transform_indices = @transform_3, window_bounds = array<i64: 64, 64>}, {pipeline_mode = #tpu.pipeline_mode<synchronous>, transform_indices = @transform_4, window_bounds = array<i64: 1, 64>}, {transform_indices = @transform_5, window_bounds = array<i64: 1, 8, 64>}, {transform_indices = @transform_6, window_bounds = array<i64: 1, 1, 128>}]} {
    %c0 = arith.constant 0 : index
    %c0_0 = arith.constant 0 : index
    %c0_1 = arith.constant 0 : index
    %0 = vector.load %arg1[%c0, %c0_0, %c0_1] : memref<1x8x64xf32, #tpu.memory_space<vmem>>, vector<1x8x64xf32>
    %1 = vector.shape_cast %0 : vector<1x8x64xf32> to vector<8x64xf32>
    %2 = vector.shape_cast %1 : vector<8x64xf32> to vector<1x8x64xf32>
    %3 = vector.extract_strided_slice %2 {offsets = [0, 4, 0], sizes = [1, 1, 64], strides = [1, 1, 1]} : vector<1x8x64xf32> to vector<1x1x64xf32>
    %4 = vector.shape_cast %3 : vector<1x1x64xf32> to vector<1x64xf32>
    %5 = vector.shape_cast %4 : vector<1x64xf32> to vector<1x1x64xf32>
    %c0_2 = arith.constant 0 : index
    %c0_3 = arith.constant 0 : index
    %c0_4 = arith.constant 0 : index
    %6 = vector.load %arg7[%c0_2, %c0_3, %c0_4] : memref<1x1x128xf32, #tpu.memory_space<vmem>>, vector<1x1x64xf32>
    tpu.vector_store %arg7[%c0_2, %c0_3, %c0_4], %5 {strides = array<i32>} : memref<1x1x128xf32, #tpu.memory_space<vmem>>, vector<1x1x64xf32>,
    %7 = arith.truncf %1 : vector<8x64xf32> to vector<8x64xbf16>
    %c0_5 = arith.constant 0 : index
    %c0_6 = arith.constant 0 : index
    %8 = vector.load %arg2[%c0_5, %c0_6] : memref<64x192xbf16, #tpu.memory_space<vmem>>, vector<64x192xbf16>
    %cst = arith.constant dense<0.000000e+00> : vector<8x192xf32>
    %9 = tpu.matmul %7, %8, %cst {dimension_numbers = #tpu.dot_dimension_numbers<[1], [0], [0], [1], [0, 0, 1, 1], [], []>} : vector<8x64xbf16>, vector<64x192xbf16>, vector<8x192xf32> -> vector<8x192xf32>
    %c0_7 = arith.constant 0 : index
    %c0_8 = arith.constant 0 : index
    %10 = vector.load %arg3[%c0_7, %c0_8] : memref<1x192xf32, #tpu.memory_space<vmem>>, vector<1x192xf32>
    %11 = vector.broadcast %10 : vector<1x192xf32> to vector<8x192xf32>
    %12 = arith.addf %9, %11 : vector<8x192xf32>
    %13 = vector.extract_strided_slice %12 {offsets = [0, 0], sizes = [8, 32], strides = [1, 1]} : vector<8x192xf32> to vector<8x32xf32>
    %14 = vector.extract_strided_slice %12 {offsets = [0, 64], sizes = [8, 32], strides = [1, 1]} : vector<8x192xf32> to vector<8x32xf32>
    %15 = vector.extract_strided_slice %12 {offsets = [0, 128], sizes = [8, 32], strides = [1, 1]} : vector<8x192xf32> to vector<8x32xf32>
    %cst_9 = arith.constant dense<0.000000e+00> : vector<8x8xf32>
    %16 = tpu.matmul %13, %14, %cst_9 {dimension_numbers = #tpu.dot_dimension_numbers<[1], [1], [0], [0], [0, 0, 1, 0], [], []>} : vector<8x32xf32>, vector<8x32xf32>, vector<8x8xf32> -> vector<8x8xf32>
    %cst_10 = arith.constant dense<0xFF800000> : vector<8xf32>
    %17 = vector.multi_reduction <maximumf>, %16, %cst_10 [1] : vector<8x8xf32> to vector<8xf32>
    %18 = vector.shape_cast %17 : vector<8xf32> to vector<8x1xf32>
    %19 = vector.broadcast %18 : vector<8x1xf32> to vector<8x8xf32>
    %20 = arith.subf %16, %19 : vector<8x8xf32>
    %21 = math.exp %20 : vector<8x8xf32>
    %cst_11 = arith.constant dense<0.000000e+00> : vector<8xf32>
    %22 = vector.multi_reduction <add>, %21, %cst_11 [1] : vector<8x8xf32> to vector<8xf32>
    %23 = vector.shape_cast %22 : vector<8xf32> to vector<8x1xf32>
    %24 = tpu.reciprocal %23 {approx = true} : vector<8x1xf32> -> vector<8x1xf32>
    %25 = vector.broadcast %24 : vector<8x1xf32> to vector<8x8xf32>
    %26 = arith.mulf %21, %25 : vector<8x8xf32>
    %cst_12 = arith.constant dense<0.000000e+00> : vector<8x32xf32>
    %27 = tpu.matmul %26, %15, %cst_12 {dimension_numbers = #tpu.dot_dimension_numbers<[1], [0], [0], [1], [0, 0, 1, 1], [], []>} : vector<8x8xf32>, vector<8x32xf32>, vector<8x32xf32> -> vector<8x32xf32>
    %c0_13 = arith.constant 0 : index
    %c0_14 = arith.constant 0 : index
    %28 = vector.load %arg8[%c0_13, %c0_14] : memref<8x64xf32, #tpu.memory_space<vmem>>, vector<8x32xf32>
    tpu.vector_store %arg8[%c0_13, %c0_14], %27 {strides = array<i32>} : memref<8x64xf32, #tpu.memory_space<vmem>>, vector<8x32xf32>,
    %29 = vector.extract_strided_slice %12 {offsets = [0, 32], sizes = [8, 32], strides = [1, 1]} : vector<8x192xf32> to vector<8x32xf32>
    %30 = vector.extract_strided_slice %12 {offsets = [0, 96], sizes = [8, 32], strides = [1, 1]} : vector<8x192xf32> to vector<8x32xf32>
    %31 = vector.extract_strided_slice %12 {offsets = [0, 160], sizes = [8, 32], strides = [1, 1]} : vector<8x192xf32> to vector<8x32xf32>
    %cst_15 = arith.constant dense<0.000000e+00> : vector<8x8xf32>
    %32 = tpu.matmul %29, %30, %cst_15 {dimension_numbers = #tpu.dot_dimension_numbers<[1], [1], [0], [0], [0, 0, 1, 0], [], []>} : vector<8x32xf32>, vector<8x32xf32>, vector<8x8xf32> -> vector<8x8xf32>
    %cst_16 = arith.constant dense<0xFF800000> : vector<8xf32>
    %33 = vector.multi_reduction <maximumf>, %32, %cst_16 [1] : vector<8x8xf32> to vector<8xf32>
    %34 = vector.shape_cast %33 : vector<8xf32> to vector<8x1xf32>
    %35 = vector.broadcast %34 : vector<8x1xf32> to vector<8x8xf32>
    %36 = arith.subf %32, %35 : vector<8x8xf32>
    %37 = math.exp %36 : vector<8x8xf32>
    %cst_17 = arith.constant dense<0.000000e+00> : vector<8xf32>
    %38 = vector.multi_reduction <add>, %37, %cst_17 [1] : vector<8x8xf32> to vector<8xf32>
    %39 = vector.shape_cast %38 : vector<8xf32> to vector<8x1xf32>
    %40 = tpu.reciprocal %39 {approx = true} : vector<8x1xf32> -> vector<8x1xf32>
    %41 = vector.broadcast %40 : vector<8x1xf32> to vector<8x8xf32>
    %42 = arith.mulf %37, %41 : vector<8x8xf32>
    %cst_18 = arith.constant dense<0.000000e+00> : vector<8x32xf32>
    %43 = tpu.matmul %42, %31, %cst_18 {dimension_numbers = #tpu.dot_dimension_numbers<[1], [0], [0], [1], [0, 0, 1, 1], [], []>} : vector<8x8xf32>, vector<8x32xf32>, vector<8x32xf32> -> vector<8x32xf32>
    %c0_19 = arith.constant 0 : index
    %c32 = arith.constant 32 : index
    %44 = vector.load %arg8[%c0_19, %c32] : memref<8x64xf32, #tpu.memory_space<vmem>>, vector<8x32xf32>
    tpu.vector_store %arg8[%c0_19, %c32], %43 {strides = array<i32>} : memref<8x64xf32, #tpu.memory_space<vmem>>, vector<8x32xf32>,
    %c0_20 = arith.constant 0 : index
    %c0_21 = arith.constant 0 : index
    %45 = vector.load %arg8[%c0_20, %c0_21] : memref<8x64xf32, #tpu.memory_space<vmem>>, vector<8x64xf32>
    %46 = arith.truncf %45 : vector<8x64xf32> to vector<8x64xbf16>
    %c0_22 = arith.constant 0 : index
    %c0_23 = arith.constant 0 : index
    %47 = vector.load %arg4[%c0_22, %c0_23] : memref<64x64xbf16, #tpu.memory_space<vmem>>, vector<64x64xbf16>
    %cst_24 = arith.constant dense<0.000000e+00> : vector<8x64xf32>
    %48 = tpu.matmul %46, %47, %cst_24 {dimension_numbers = #tpu.dot_dimension_numbers<[1], [0], [0], [1], [0, 0, 1, 1], [], []>} : vector<8x64xbf16>, vector<64x64xbf16>, vector<8x64xf32> -> vector<8x64xf32>
    %c0_25 = arith.constant 0 : index
    %c0_26 = arith.constant 0 : index
    %49 = vector.load %arg5[%c0_25, %c0_26] : memref<1x64xf32, #tpu.memory_space<vmem>>, vector<1x64xf32>
    %50 = vector.broadcast %49 : vector<1x64xf32> to vector<8x64xf32>
    %51 = arith.addf %48, %50 : vector<8x64xf32>
    %52 = vector.shape_cast %51 : vector<8x64xf32> to vector<1x8x64xf32>
    %53 = vector.extract_strided_slice %52 {offsets = [0, 4, 0], sizes = [1, 1, 64], strides = [1, 1, 1]} : vector<1x8x64xf32> to vector<1x1x64xf32>
    %54 = vector.shape_cast %53 : vector<1x1x64xf32> to vector<1x64xf32>
    %55 = vector.shape_cast %54 : vector<1x64xf32> to vector<1x1x64xf32>
    %c0_27 = arith.constant 0 : index
    %c0_28 = arith.constant 0 : index
    %c64 = arith.constant 64 : index
    %56 = vector.load %arg7[%c0_27, %c0_28, %c64] : memref<1x1x128xf32, #tpu.memory_space<vmem>>, vector<1x1x64xf32>
    tpu.vector_store %arg7[%c0_27, %c0_28, %c64], %55 {strides = array<i32>} : memref<1x1x128xf32, #tpu.memory_space<vmem>>, vector<1x1x64xf32>,
    %57 = arith.truncf %51 : vector<8x64xf32> to vector<8x64xbf16>
    %c0_29 = arith.constant 0 : index
    %c0_30 = arith.constant 0 : index
    %58 = vector.load %arg2[%c0_29, %c0_30] : memref<64x192xbf16, #tpu.memory_space<vmem>>, vector<64x192xbf16>
    %cst_31 = arith.constant dense<0.000000e+00> : vector<8x192xf32>
    %59 = tpu.matmul %57, %58, %cst_31 {dimension_numbers = #tpu.dot_dimension_numbers<[1], [0], [0], [1], [0, 0, 1, 1], [], []>} : vector<8x64xbf16>, vector<64x192xbf16>, vector<8x192xf32> -> vector<8x192xf32>
    %c0_32 = arith.constant 0 : index
    %c0_33 = arith.constant 0 : index
    %60 = vector.load %arg3[%c0_32, %c0_33] : memref<1x192xf32, #tpu.memory_space<vmem>>, vector<1x192xf32>
    %61 = vector.broadcast %60 : vector<1x192xf32> to vector<8x192xf32>
    %62 = arith.addf %59, %61 : vector<8x192xf32>
    %63 = vector.extract_strided_slice %62 {offsets = [0, 0], sizes = [8, 32], strides = [1, 1]} : vector<8x192xf32> to vector<8x32xf32>
    %64 = vector.extract_strided_slice %62 {offsets = [0, 64], sizes = [8, 32], strides = [1, 1]} : vector<8x192xf32> to vector<8x32xf32>
    %65 = vector.extract_strided_slice %62 {offsets = [0, 128], sizes = [8, 32], strides = [1, 1]} : vector<8x192xf32> to vector<8x32xf32>
    %cst_34 = arith.constant dense<0.000000e+00> : vector<8x8xf32>
    %66 = tpu.matmul %63, %64, %cst_34 {dimension_numbers = #tpu.dot_dimension_numbers<[1], [1], [0], [0], [0, 0, 1, 0], [], []>} : vector<8x32xf32>, vector<8x32xf32>, vector<8x8xf32> -> vector<8x8xf32>
    %cst_35 = arith.constant dense<0xFF800000> : vector<8xf32>
    %67 = vector.multi_reduction <maximumf>, %66, %cst_35 [1] : vector<8x8xf32> to vector<8xf32>
    %68 = vector.shape_cast %67 : vector<8xf32> to vector<8x1xf32>
    %69 = vector.broadcast %68 : vector<8x1xf32> to vector<8x8xf32>
    %70 = arith.subf %66, %69 : vector<8x8xf32>
    %71 = math.exp %70 : vector<8x8xf32>
    %cst_36 = arith.constant dense<0.000000e+00> : vector<8xf32>
    %72 = vector.multi_reduction <add>, %71, %cst_36 [1] : vector<8x8xf32> to vector<8xf32>
    %73 = vector.shape_cast %72 : vector<8xf32> to vector<8x1xf32>
    %74 = tpu.reciprocal %73 {approx = true} : vector<8x1xf32> -> vector<8x1xf32>
    %75 = vector.broadcast %74 : vector<8x1xf32> to vector<8x8xf32>
    %76 = arith.mulf %71, %75 : vector<8x8xf32>
    %cst_37 = arith.constant dense<0.000000e+00> : vector<8x32xf32>
    %77 = tpu.matmul %76, %65, %cst_37 {dimension_numbers = #tpu.dot_dimension_numbers<[1], [0], [0], [1], [0, 0, 1, 1], [], []>} : vector<8x8xf32>, vector<8x32xf32>, vector<8x32xf32> -> vector<8x32xf32>
    %c0_38 = arith.constant 0 : index
    %c0_39 = arith.constant 0 : index
    %78 = vector.load %arg8[%c0_38, %c0_39] : memref<8x64xf32, #tpu.memory_space<vmem>>, vector<8x32xf32>
    tpu.vector_store %arg8[%c0_38, %c0_39], %77 {strides = array<i32>} : memref<8x64xf32, #tpu.memory_space<vmem>>, vector<8x32xf32>,
    %79 = vector.extract_strided_slice %62 {offsets = [0, 32], sizes = [8, 32], strides = [1, 1]} : vector<8x192xf32> to vector<8x32xf32>
    %80 = vector.extract_strided_slice %62 {offsets = [0, 96], sizes = [8, 32], strides = [1, 1]} : vector<8x192xf32> to vector<8x32xf32>
    %81 = vector.extract_strided_slice %62 {offsets = [0, 160], sizes = [8, 32], strides = [1, 1]} : vector<8x192xf32> to vector<8x32xf32>
    %cst_40 = arith.constant dense<0.000000e+00> : vector<8x8xf32>
    %82 = tpu.matmul %79, %80, %cst_40 {dimension_numbers = #tpu.dot_dimension_numbers<[1], [1], [0], [0], [0, 0, 1, 0], [], []>} : vector<8x32xf32>, vector<8x32xf32>, vector<8x8xf32> -> vector<8x8xf32>
    %cst_41 = arith.constant dense<0xFF800000> : vector<8xf32>
    %83 = vector.multi_reduction <maximumf>, %82, %cst_41 [1] : vector<8x8xf32> to vector<8xf32>
    %84 = vector.shape_cast %83 : vector<8xf32> to vector<8x1xf32>
    %85 = vector.broadcast %84 : vector<8x1xf32> to vector<8x8xf32>
    %86 = arith.subf %82, %85 : vector<8x8xf32>
    %87 = math.exp %86 : vector<8x8xf32>
    %cst_42 = arith.constant dense<0.000000e+00> : vector<8xf32>
    %88 = vector.multi_reduction <add>, %87, %cst_42 [1] : vector<8x8xf32> to vector<8xf32>
    %89 = vector.shape_cast %88 : vector<8xf32> to vector<8x1xf32>
    %90 = tpu.reciprocal %89 {approx = true} : vector<8x1xf32> -> vector<8x1xf32>
    %91 = vector.broadcast %90 : vector<8x1xf32> to vector<8x8xf32>
    %92 = arith.mulf %87, %91 : vector<8x8xf32>
    %cst_43 = arith.constant dense<0.000000e+00> : vector<8x32xf32>
    %93 = tpu.matmul %92, %81, %cst_43 {dimension_numbers = #tpu.dot_dimension_numbers<[1], [0], [0], [1], [0, 0, 1, 1], [], []>} : vector<8x8xf32>, vector<8x32xf32>, vector<8x32xf32> -> vector<8x32xf32>
    %c0_44 = arith.constant 0 : index
    %c32_45 = arith.constant 32 : index
    %94 = vector.load %arg8[%c0_44, %c32_45] : memref<8x64xf32, #tpu.memory_space<vmem>>, vector<8x32xf32>
    tpu.vector_store %arg8[%c0_44, %c32_45], %93 {strides = array<i32>} : memref<8x64xf32, #tpu.memory_space<vmem>>, vector<8x32xf32>,
    %c0_46 = arith.constant 0 : index
    %c0_47 = arith.constant 0 : index
    %95 = vector.load %arg8[%c0_46, %c0_47] : memref<8x64xf32, #tpu.memory_space<vmem>>, vector<8x64xf32>
    %96 = arith.truncf %95 : vector<8x64xf32> to vector<8x64xbf16>
    %c0_48 = arith.constant 0 : index
    %c0_49 = arith.constant 0 : index
    %97 = vector.load %arg4[%c0_48, %c0_49] : memref<64x64xbf16, #tpu.memory_space<vmem>>, vector<64x64xbf16>
    %cst_50 = arith.constant dense<0.000000e+00> : vector<8x64xf32>
    %98 = tpu.matmul %96, %97, %cst_50 {dimension_numbers = #tpu.dot_dimension_numbers<[1], [0], [0], [1], [0, 0, 1, 1], [], []>} : vector<8x64xbf16>, vector<64x64xbf16>, vector<8x64xf32> -> vector<8x64xf32>
    %c0_51 = arith.constant 0 : index
    %c0_52 = arith.constant 0 : index
    %99 = vector.load %arg5[%c0_51, %c0_52] : memref<1x64xf32, #tpu.memory_space<vmem>>, vector<1x64xf32>
    %100 = vector.broadcast %99 : vector<1x64xf32> to vector<8x64xf32>
    %101 = arith.addf %98, %100 : vector<8x64xf32>
    %102 = vector.shape_cast %101 : vector<8x64xf32> to vector<1x8x64xf32>
    %c0_53 = arith.constant 0 : index
    %c0_54 = arith.constant 0 : index
    %c0_55 = arith.constant 0 : index
    %103 = vector.load %arg6[%c0_53, %c0_54, %c0_55] : memref<1x8x64xf32, #tpu.memory_space<vmem>>, vector<1x8x64xf32>
    tpu.vector_store %arg6[%c0_53, %c0_54, %c0_55], %102 {strides = array<i32>} : memref<1x8x64xf32, #tpu.memory_space<vmem>>, vector<1x8x64xf32>,
    return
  }
  func.func @transform_0(%arg0: i32) -> (i32, i32, i32) {
    %c0_i32 = arith.constant 0 : i32
    %c0_i32_0 = arith.constant 0 : i32
    %c0_i32_1 = arith.constant 0 : i32
    return %arg0, %c0_i32, %c0_i32_0 : i32, i32, i32
  }
  func.func @transform_1(%arg0: i32) -> (i32, i32) {
    %c0_i32 = arith.constant 0 : i32
    %c0_i32_0 = arith.constant 0 : i32
    %c0_i32_1 = arith.constant 0 : i32
    return %c0_i32, %c0_i32_0 : i32, i32
  }
  func.func @transform_2(%arg0: i32) -> (i32, i32) {
    %c0_i32 = arith.constant 0 : i32
    %c0_i32_0 = arith.constant 0 : i32
    %c0_i32_1 = arith.constant 0 : i32
    return %c0_i32, %c0_i32_0 : i32, i32
  }
  func.func @transform_3(%arg0: i32) -> (i32, i32) {
    %c0_i32 = arith.constant 0 : i32
    %c0_i32_0 = arith.constant 0 : i32
    %c0_i32_1 = arith.constant 0 : i32
    return %c0_i32, %c0_i32_0 : i32, i32
  }
  func.func @transform_4(%arg0: i32) -> (i32, i32) {
    %c0_i32 = arith.constant 0 : i32
    %c0_i32_0 = arith.constant 0 : i32
    %c0_i32_1 = arith.constant 0 : i32
    return %c0_i32, %c0_i32_0 : i32, i32
  }
  func.func @transform_5(%arg0: i32) -> (i32, i32, i32) {
    %c0_i32 = arith.constant 0 : i32
    %c0_i32_0 = arith.constant 0 : i32
    %c0_i32_1 = arith.constant 0 : i32
    return %arg0, %c0_i32, %c0_i32_0 : i32, i32, i32
  }
  func.func @transform_6(%arg0: i32) -> (i32, i32, i32) {
    %c0_i32 = arith.constant 0 : i32
    %c0_i32_0 = arith.constant 0 : i32
    %c0_i32_1 = arith.constant 0 : i32
    return %arg0, %c0_i32, %c0_i32_0 : i32, i32, i32
  }
}

</mosaic_0001>

<llo_original>
// kernel: tpu_custom_call.1
$region0: #{tpu_custom_call.1}
  #allocation0 [shape = 'u32[]', space=smem, size = 0x4, offset = 0x4, fixed_abs, tag = 'smem constant byte address 0x4 - core index']
  #allocation1 [shape = 'u32[144,128]{1,0:T(1,128)}', space=vmem, size = 0x12000, scoped, tag = 'internal scratch']
  #allocation2 [shape = 'f32[8,64]{1,0:T(8,128)}', space=vmem, size = 0x1000, scoped, tag = 'scratch operand']
  %s0 = inlined_call_operand.hbm [shape: f32[2,8,64], index: 0, kind: input, shape index: {}]
  %s1 = inlined_call_operand.hbm [shape: bf16[64,192], index: 1, kind: input, shape index: {}]
  %s2 = inlined_call_operand.vmem [shape: f32[1,192], index: 2, kind: input, shape index: {}]
  %s3 = inlined_call_operand.hbm [shape: bf16[64,64], index: 3, kind: input, shape index: {}]
  %s4 = inlined_call_operand.vmem [shape: f32[1,64], index: 4, kind: input, shape index: {}]
  %s5 = inlined_call_operand.hbm [shape: f32[2,8,64], index: 5, kind: output, shape index: {0}]
  %s6 = inlined_call_operand.hbm [shape: f32[2,1,128], index: 6, kind: output, shape index: {1}]
  %7 = xla_tuple %s5, %s6
  %s8 = sld [smem:[#allocation0]]
  $region73: #{tpu_custom_call.1} parent=0
    _
  %s10 = ssub.s32 1, %s8
  %s11 = scalar_select 0, %s10, %s8
  $region1: #{tpu_custom_call.1} parent=0
    #allocation3 [shape = 'u8[8192]{0}', space=vmem, size = 0x2000, scoped, tag = 'input window, operand 0']
    #allocation4 [shape = 's32[2]{0}', space=sflag, size = 0x8, scoped, tag = 'scoped memory for tpu_custom_call.1']
    #allocation5 [shape = 's32[2]{0}', space=sflag, size = 0x8, scoped, tag = 'scoped memory for tpu_custom_call.1']
    #allocation6 [shape = 'u8[32768]{0}', space=vmem, size = 0x8000, scoped, tag = 'input window, operand 1, single buffered']
    #allocation7 [shape = 's32[1]{0}', space=sflag, size = 0x4, scoped, tag = 'scoped memory for tpu_custom_call.1']
    #allocation8 [shape = 'u8[16384]{0}', space=vmem, size = 0x4000, scoped, tag = 'input window, operand 3, single buffered']
    #allocation9 [shape = 'u8[8192]{0}', space=vmem, size = 0x2000, scoped, tag = 'output window, operand 0']
    #allocation10 [shape = 'u8[1024]{0}', space=vmem, size = 0x400, scoped, tag = 'output window, operand 1']
    #allocation11 [shape = 's32[2]{0}', space=sflag, size = 0x8, scoped, tag = 'scoped memory for tpu_custom_call.1']
    %12 = vsyncpa [#allocation4], 0
    %s13 = scalar_lea.sflag [#allocation4], 1
    %14 = vsyncpa %s13, 0
    %15 = vsyncpa [#allocation7], 0
    %16 = vsyncpa [#allocation5], 0
    %s17 = scalar_lea.sflag [#allocation5], 1
    %18 = vsyncpa %s17, 0
    %19 = vsyncpa [#allocation11], 0
    %s20 = scalar_lea.sflag [#allocation11], 1
    %21 = vsyncpa %s20, 0
    loop: start=0, step=1, limit=4
    $region2: #{tpu_custom_call.1} parent=1 // loop_pre_header
      _
    $region3: #{tpu_custom_call.1} parent=1 // loop_header
      %s23 = sphi 0, %s27
      %p24 = scmp.ge.s32.totalorder %s23, 4
      %s33 = sphi 0, %s35
      %s36 = sphi 0, %s33
      %s37 = sphi 0, %s36
      %s53 = sphi 0, %s37
      %s57 = sphi 0, %s57
      %s59 = sphi 0, %s57
      %s60 = sphi 0, %s59
      %s74 = sphi 0, %s60
      %s78 = sphi 0, %s78
      %s80 = sphi 0, %s78
      %s81 = sphi 0, %s80
      %s95 = sphi 0, %s81
      %s99 = sphi 0, %s99
      %s101 = sphi 0, %s99
      %s102 = sphi 0, %s101
      %s116 = sphi 0, %s102
      %s120 = sphi 0, %s120
      %s122 = sphi 0, %s120
      %s123 = sphi 0, %s122
      %s137 = sphi 0, %s123
      %s143 = sphi 0, %s145
      %s146 = sphi 0, %s143
      %s147 = sphi 0, %s146
      %s163 = sphi 0, %s147
      %s169 = sphi 0, %s171
      %s172 = sphi 0, %s169
      %s173 = sphi 0, %s172
      %s189 = sphi 0, %s173
    $region4: #{tpu_custom_call.1} parent=1 // loop_header_branch
      %26 = sbr.rel (%p24) target = $region8
    $region5: #{tpu_custom_call.1} parent=1 // loop_body
      %s28 = ssub.s32 %s23, 1
      %s29 = ssub.s32 %s23, 2
      %s30 = sadd.s32 %s23, 1
      %s31 = ssub.s32 %s23, %s30
      %p32 = scmp.eq.s32.totalorder %s31, 0
      %s34 = sadd.s32 %s33, 1
      %s35 = scalar_select %p32, %s33, %s34
      %p38 = pneg %p32
      %p39 = scmp.eq.s32.totalorder %s23, 1
      %p40 = por %p38, %p39
      %p41 = scmp.ne.s32.totalorder %s33, %s36
      %p42 = scmp.eq.s32.totalorder %s23, 0
      %p43 = por %p41, %p42
      %p44 = scmp.ne.s32.totalorder %s33, %s36
      %p45 = scmp.eq.s32.totalorder %s28, 1
      %p46 = por %p44, %p45
      %p47 = scmp.ne.s32.totalorder %s36, %s37
      %p48 = scmp.eq.s32.totalorder %s28, 0
      %p49 = por %p47, %p48
      %p50 = scmp.ne.s32.totalorder %s36, %s37
      %p51 = scmp.eq.s32.totalorder %s29, 1
      %p52 = por %p50, %p51
      %p54 = scmp.ne.s32.totalorder %s37, %s53
      %p55 = scmp.eq.s32.totalorder %s29, 0
      %p56 = por %p54, %p55
      %s58 = sadd.s32 %s57, 1
      %p61 = scmp.eq.s32.totalorder %s23, 1
      %p62 = scmp.ne.s32.totalorder %s57, %s59
      %p63 = scmp.eq.s32.totalorder %s23, 0
      %p64 = por %p62, %p63
      %p65 = scmp.ne.s32.totalorder %s57, %s59
      %p66 = scmp.eq.s32.totalorder %s28, 1
      %p67 = por %p65, %p66
      %p68 = scmp.ne.s32.totalorder %s59, %s60
      %p69 = scmp.eq.s32.totalorder %s28, 0
      %p70 = por %p68, %p69
      %p71 = scmp.ne.s32.totalorder %s59, %s60
      %p72 = scmp.eq.s32.totalorder %s29, 1
      %p73 = por %p71, %p72
      %p75 = scmp.ne.s32.totalorder %s60, %s74
      %p76 = scmp.eq.s32.totalorder %s29, 0
      %p77 = por %p75, %p76
      %s79 = sadd.s32 %s78, 1
      %p82 = scmp.eq.s32.totalorder %s23, 1
      %p83 = scmp.ne.s32.totalorder %s78, %s80
      %p84 = scmp.eq.s32.totalorder %s23, 0
      %p85 = por %p83, %p84
      %p86 = scmp.ne.s32.totalorder %s78, %s80
      %p87 = scmp.eq.s32.totalorder %s28, 1
      %p88 = por %p86, %p87
      %p89 = scmp.ne.s32.totalorder %s80, %s81
      %p90 = scmp.eq.s32.totalorder %s28, 0
      %p91 = por %p89, %p90
      %p92 = scmp.ne.s32.totalorder %s80, %s81
      %p93 = scmp.eq.s32.totalorder %s29, 1
      %p94 = por %p92, %p93
      %p96 = scmp.ne.s32.totalorder %s81, %s95
      %p97 = scmp.eq.s32.totalorder %s29, 0
      %p98 = por %p96, %p97
      %s100 = sadd.s32 %s99, 1
      %p103 = scmp.eq.s32.totalorder %s23, 1
      %p104 = scmp.ne.s32.totalorder %s99, %s101
      %p105 = scmp.eq.s32.totalorder %s23, 0
      %p106 = por %p104, %p105
      %p107 = scmp.ne.s32.totalorder %s99, %s101
      %p108 = scmp.eq.s32.totalorder %s28, 1
      %p109 = por %p107, %p108
      %p110 = scmp.ne.s32.totalorder %s101, %s102
      %p111 = scmp.eq.s32.totalorder %s28, 0
      %p112 = por %p110, %p111
      %p113 = scmp.ne.s32.totalorder %s101, %s102
      %p114 = scmp.eq.s32.totalorder %s29, 1
      %p115 = por %p113, %p114
      %p117 = scmp.ne.s32.totalorder %s102, %s116
      %p118 = scmp.eq.s32.totalorder %s29, 0
      %p119 = por %p117, %p118
      %s121 = sadd.s32 %s120, 1
      %p124 = scmp.eq.s32.totalorder %s23, 1
      %p125 = scmp.ne.s32.totalorder %s120, %s122
      %p126 = scmp.eq.s32.totalorder %s23, 0
      %p127 = por %p125, %p126
      %p128 = scmp.ne.s32.totalorder %s120, %s122
      %p129 = scmp.eq.s32.totalorder %s28, 1
      %p130 = por %p128, %p129
      %p131 = scmp.ne.s32.totalorder %s122, %s123
      %p132 = scmp.eq.s32.totalorder %s28, 0
      %p133 = por %p131, %p132
      %p134 = scmp.ne.s32.totalorder %s122, %s123
      %p135 = scmp.eq.s32.totalorder %s29, 1
      %p136 = por %p134, %p135
      %p138 = scmp.ne.s32.totalorder %s123, %s137
      %p139 = scmp.eq.s32.totalorder %s29, 0
      %p140 = por %p138, %p139
      %s141 = ssub.s32 %s23, %s30
      %p142 = scmp.eq.s32.totalorder %s141, 0
      %s144 = sadd.s32 %s143, 1
      %s145 = scalar_select %p142, %s143, %s144
      %p148 = pneg %p142
      %p149 = scmp.eq.s32.totalorder %s23, 1
      %p150 = por %p148, %p149
      %p151 = scmp.ne.s32.totalorder %s143, %s146
      %p152 = scmp.eq.s32.totalorder %s23, 0
      %p153 = por %p151, %p152
      %p154 = scmp.ne.s32.totalorder %s143, %s146
      %p155 = scmp.eq.s32.totalorder %s28, 1
      %p156 = por %p154, %p155
      %p157 = scmp.ne.s32.totalorder %s146, %s147
      %p158 = scmp.eq.s32.totalorder %s28, 0
      %p159 = por %p157, %p158
      %p160 = scmp.ne.s32.totalorder %s146, %s147
      %p161 = scmp.eq.s32.totalorder %s29, 1
      %p162 = por %p160, %p161
      %p164 = scmp.ne.s32.totalorder %s147, %s163
      %p165 = scmp.eq.s32.totalorder %s29, 0
      %p166 = por %p164, %p165
      %s167 = ssub.s32 %s23, %s30
      %p168 = scmp.eq.s32.totalorder %s167, 0
      %s170 = sadd.s32 %s169, 1
      %s171 = scalar_select %p168, %s169, %s170
      %p174 = pneg %p168
      %p175 = scmp.eq.s32.totalorder %s23, 1
      %p176 = por %p174, %p175
      %p177 = scmp.ne.s32.totalorder %s169, %s172
      %p178 = scmp.eq.s32.totalorder %s23, 0
      %p179 = por %p177, %p178
      %p180 = scmp.ne.s32.totalorder %s169, %s172
      %p181 = scmp.eq.s32.totalorder %s28, 1
      %p182 = por %p180, %p181
      %p183 = scmp.ne.s32.totalorder %s172, %s173
      %p184 = scmp.eq.s32.totalorder %s28, 0
      %p185 = por %p183, %p184
      %p186 = scmp.ne.s32.totalorder %s172, %s173
      %p187 = scmp.eq.s32.totalorder %s29, 1
      %p188 = por %p186, %p187
      %p190 = scmp.ne.s32.totalorder %s173, %s189
      %p191 = scmp.eq.s32.totalorder %s29, 0
      %p192 = por %p190, %p191
      %p193 = scmp.le.s32.totalorder 1, %s23
      %p194 = scmp.lt.s32.totalorder %s23, 3
      %p195 = pnand %p193, %p194
      %p196 = pneg %p195
      // Predicated region
      $region9: #{tpu_custom_call.1} parent=5 // pred_check
        _
      $region10: #{tpu_custom_call.1} parent=5 // pred_check_branch
        %198 = sbr.rel (%p195) target = $region12
      $region11: #{tpu_custom_call.1} parent=5 // pred_region
        %s199 = ssub.s32 %s23, 1
        // Predicated region
        $region13: #{tpu_custom_call.1} parent=11 // pred_check
          %p200 = pneg %p70
        $region14: #{tpu_custom_call.1} parent=11 // pred_check_branch
          %202 = sbr.rel (%p200) target = $region16
        $region15: #{tpu_custom_call.1} parent=11 // pred_region
          %s204 = ssub.s32 1024, 1024
          %205 = vsyncadd [#allocation7], %s204
          %s206 = sshll.u32 [#allocation6], 4
          %s207 = int_to_ptr.vmem [resolvable:$true] %s206
          %212 = dma.hbm_to_vmem [thread:$0]  %s1, 1024, %s207, [#allocation7], 128, 128, 8
        $region16: #{tpu_custom_call.1} parent=11 // pred_fallthru
          _
        // Predicated region
        $region17: #{tpu_custom_call.1} parent=11 // pred_check
          %p213 = pneg %p91
        $region18: #{tpu_custom_call.1} parent=11 // pred_check_branch
          %215 = sbr.rel (%p213) target = $region20
        $region19: #{tpu_custom_call.1} parent=11 // pred_region
          _
        $region20: #{tpu_custom_call.1} parent=11 // pred_fallthru
          _
        // Predicated region
        $region21: #{tpu_custom_call.1} parent=11 // pred_check
          %p216 = pneg %p112
        $region22: #{tpu_custom_call.1} parent=11 // pred_check_branch
          %218 = sbr.rel (%p216) target = $region24
        $region23: #{tpu_custom_call.1} parent=11 // pred_region
          %s220 = ssub.s32 512, 512
          %221 = vsyncadd [#allocation7], %s220
          %s222 = sshll.u32 [#allocation8], 4
          %s223 = int_to_ptr.vmem [resolvable:$true] %s222
          %228 = dma.hbm_to_vmem [thread:$0]  %s3, 512, %s223, [#allocation7], 64, 64, 4
        $region24: #{tpu_custom_call.1} parent=11 // pred_fallthru
          _
        // Predicated region
        $region25: #{tpu_custom_call.1} parent=11 // pred_check
          %p229 = pneg %p133
        $region26: #{tpu_custom_call.1} parent=11 // pred_check_branch
          %231 = sbr.rel (%p229) target = $region28
        $region27: #{tpu_custom_call.1} parent=11 // pred_region
          _
        $region28: #{tpu_custom_call.1} parent=11 // pred_fallthru
          _
      $region12: #{tpu_custom_call.1} parent=5 // pred_fallthru
        _
      %p232 = scmp.lt.s32.totalorder %s23, 2
      // Predicated region
      $region29: #{tpu_custom_call.1} parent=5 // pred_check
        %p233 = pneg %p232
      $region30: #{tpu_custom_call.1} parent=5 // pred_check_branch
        %235 = sbr.rel (%p233) target = $region32
      $region31: #{tpu_custom_call.1} parent=5 // pred_region
        // Predicated region
        $region33: #{tpu_custom_call.1} parent=31 // pred_check
          %p236 = pneg %p43
        $region34: #{tpu_custom_call.1} parent=31 // pred_check_branch
          %238 = sbr.rel (%p236) target = $region36
        $region35: #{tpu_custom_call.1} parent=31 // pred_region
          %s239 = sand.u32 %s33, 1
          %s240 = scalar_lea.sflag [#allocation4], %s239
          %s241 = sand.u32 %s33, 1
          %s242 = smul.addr %s241, 8
          %s243 = scalar_lea.vmem [#allocation3], %s242
          %s245 = ssub.s32 128, 128
          %246 = vsyncadd %s240, %s245
          %s247 = smul.addr %s23, 128
          %s248 = scalar_lea.hbm %s0, %s247
          %s250 = sshll.u32 %s243, 4
          %s251 = int_to_ptr.vmem [resolvable:$true] %s250
          %253 = dma.hbm_to_vmem [thread:$0]  %s248, 128, %s251, %s240
        $region36: #{tpu_custom_call.1} parent=31 // pred_fallthru
          _
      $region32: #{tpu_custom_call.1} parent=5 // pred_fallthru
        _
      %p254 = scmp.le.s32.totalorder 1, %s23
      %p255 = scmp.lt.s32.totalorder %s23, 3
      %p256 = pnand %p254, %p255
      %p257 = pneg %p256
      // Predicated region
      $region37: #{tpu_custom_call.1} parent=5 // pred_check
        _
      $region38: #{tpu_custom_call.1} parent=5 // pred_check_branch
        %259 = sbr.rel (%p256) target = $region40
      $region39: #{tpu_custom_call.1} parent=5 // pred_region
        %s260 = ssub.s32 %s23, 1
        %s261 = sand.u32 %s36, 1
        %s262 = scalar_lea.sflag [#allocation4], %s261
        %s263 = sand.u32 %s36, 1
        %s264 = smul.addr %s263, 8
        %s265 = scalar_lea.vmem [#allocation3], %s264
        // Predicated region
        $region41: #{tpu_custom_call.1} parent=39 // pred_check
          %p266 = pneg %p49
        $region42: #{tpu_custom_call.1} parent=39 // pred_check_branch
          %268 = sbr.rel (%p266) target = $region44
        $region43: #{tpu_custom_call.1} parent=39 // pred_region
          %269 = dma.done %s262, 128
        $region44: #{tpu_custom_call.1} parent=39 // pred_fallthru
          _
        // Predicated region
        $region45: #{tpu_custom_call.1} parent=39 // pred_check
          %p270 = pneg %p70
        $region46: #{tpu_custom_call.1} parent=39 // pred_check_branch
          %272 = sbr.rel (%p270) target = $region48
        $region47: #{tpu_custom_call.1} parent=39 // pred_region
          %273 = dma.done [#allocation7], 1024
        $region48: #{tpu_custom_call.1} parent=39 // pred_fallthru
          _
        // Predicated region
        $region49: #{tpu_custom_call.1} parent=39 // pred_check
          %p274 = pneg %p112
        $region50: #{tpu_custom_call.1} parent=39 // pred_check_branch
          %276 = sbr.rel (%p274) target = $region52
        $region51: #{tpu_custom_call.1} parent=39 // pred_region
          %277 = dma.done [#allocation7], 512
        $region52: #{tpu_custom_call.1} parent=39 // pred_fallthru
          _
        %s278 = sand.u32 %s36, 1
        %s279 = scalar_lea.sflag [#allocation4], %s278
        %s280 = sand.u32 %s36, 1
        %s281 = smul.addr %s280, 8
        %s282 = scalar_lea.vmem [#allocation3], %s281
        %p283 = pneg %p49
        %p284 = pneg %p46
        %p285 = pneg %p70
        %p286 = pneg %p67
        %p287 = pneg %p91
        %p288 = pneg %p88
        %p289 = pneg %p112
        %p290 = pneg %p109
        %p291 = pneg %p133
        %p292 = pneg %p130
        %p293 = pneg %p159
        %p294 = pneg %p156
        %s295 = sand.u32 %s146, 1
        %s296 = scalar_lea.sflag [#allocation5], %s295
        %s297 = sand.u32 %s146, 1
        %s298 = smul.addr %s297, 8
        %s299 = scalar_lea.vmem [#allocation9], %s298
        %p300 = pneg %p185
        %p301 = pneg %p182
        %s302 = sand.u32 %s172, 1
        %s303 = scalar_lea.sflag [#allocation11], %s302
        %s304 = sand.u32 %s172, 1
        %s305 = scalar_lea.vmem [#allocation10], %s304
        %v307 = vld [vmem:[%s265] sm:$0xff]
        %vm308 = vcmask 520196
        %309 = vst.msk [vmem:[%s305 - $0x4] sm:$0x10] %vm308, %v307
        %v310 = vpack.c.bf16 %v307, %v307
        %v311 = vld [vmem:[#allocation6] sm:$0xff]
        %v312 = vld [vmem:[#allocation6 + $0x8] sm:$0xff]
        %v313 = vld [vmem:[#allocation6 + $0x10] sm:$0xff]
        %v314 = vld [vmem:[#allocation6 + $0x18] sm:$0xff]
        %v315 = vld [vmem:[#allocation6 + $0x20] sm:$0xff]
        %v316 = vld [vmem:[#allocation6 + $0x28] sm:$0xff]
        %v317 = vld [vmem:[#allocation6 + $0x30] sm:$0xff]
        %v318 = vld [vmem:[#allocation6 + $0x38] sm:$0xff]
        %v319 = vld [vmem:[%s2] sm:$0x3]
        %v321 = vlaneseq
        %v322 = vshrl.u32 %v321, 7
        %v323 = vsub.s32 0, %v322
        %v324 = vrot.slane %v319, %v323
        %v325 = vlaneseq
        %v326 = vshrl.u32 %v325, 7
        %v327 = vsub.s32 1, %v326
        %v328 = vrot.slane %v319, %v327
        %v339 = vunpack.c.l.b16 %v311
        %v340 = vunpack.c.h.b16 %v311
        %v341 = vunpack.c.l.b16 %v312
        %v342 = vunpack.c.h.b16 %v312
        %v343 = vunpack.c.l.b16 %v313
        %v344 = vunpack.c.h.b16 %v313
        %v345 = vunpack.c.l.b16 %v314
        %v346 = vunpack.c.h.b16 %v314
        %v347 = vunpack.c.l.b16 %v315
        %v348 = vunpack.c.h.b16 %v315
        %v349 = vunpack.c.l.b16 %v316
        %v350 = vunpack.c.h.b16 %v316
        %v351 = vunpack.c.l.b16 %v317
        %v352 = vunpack.c.h.b16 %v317
        %v353 = vunpack.c.l.b16 %v318
        %v354 = vunpack.c.h.b16 %v318
        %v355 = vpack.c.b16 %v341, %v339
        %v356 = vpack.c.b16 %v342, %v340
        %v357 = vpack.c.b16 %v345, %v343
        %v358 = vpack.c.b16 %v346, %v344
        %v359 = vpack.c.b16 %v349, %v347
        %v360 = vpack.c.b16 %v350, %v348
        %v361 = vpack.c.b16 %v353, %v351
        %v362 = vpack.c.b16 %v354, %v352
        %vm371 = vcmask 523264
        %v373 = vsel %vm371, %v310, 0
        %375 = vmatprep.subr.bf16.mxu0 %v356
        %376 = vmatpush1.bf16.msra.mxu0 %v355
        %377 = vmatprep.subr.bf16.mxu0 %v358
        %378 = vmatpush1.bf16.msra.mxu0 %v357
        %379 = vmatprep.subr.bf16.mxu0 %v360
        %380 = vmatpush1.bf16.msra.mxu0 %v359
        %381 = vmatprep.subr.bf16.mxu0 %v362
        %382 = vmatpush1.bf16.msra.mxu0 %v361
        %383 = vmatprep.subr.bf16.mxu0 0
        %384 = vmatpush1.bf16.msra.mxu0 0
        %385 = vmatprep.subr.bf16.mxu0 0
        %386 = vmatpush1.bf16.msra.mxu0 0
        %387 = vmatprep.subr.bf16.mxu0 0
        %388 = vmatpush1.bf16.msra.mxu0 0
        %389 = vmatprep.subr.bf16.mxu0 0
        %390 = vmatpush1.bf16.msra.mxu0 0
        %391 = vmatprep.subr.bf16.mxu0 0
        %392 = vmatpush1.bf16.msra.mxu0 0
        %393 = vmatprep.subr.bf16.mxu0 0
        %394 = vmatpush1.bf16.msra.mxu0 0
        %395 = vmatprep.subr.bf16.mxu0 0
        %396 = vmatpush1.bf16.msra.mxu0 0
        %397 = vmatprep.subr.bf16.mxu0 0
        %398 = vmatpush1.bf16.msra.mxu0 0
        %399 = vmatprep.subr.bf16.mxu0 0
        %400 = vmatpush1.bf16.msra.mxu0 0
        %401 = vmatprep.subr.bf16.mxu0 0
        %402 = vmatpush1.bf16.msra.mxu0 0
        %403 = vmatprep.subr.bf16.mxu0 0
        %404 = vmatpush1.bf16.msra.mxu0 0
        %405 = vmatprep.subr.bf16.mxu0 0
        %406 = vmatpush1.bf16.msra.mxu0 0
        %407 = vmatprep.mubr.bf16.mxu0 0
        %408 = vmatmul.mubr.bf16.gmra.mrb[0].mxu0 %v373
        %v409 = vpop.f32.mrb[0].mxu0
        %v410 = vadd.f32 %v324, %v409
        %v411 = vpop.f32.mrb[0].mxu0
        %v412 = vadd.f32 %v328, %v411
        %v413 = vpop.f32.mrb[0].mxu0
        %v414 = vpop.f32.mrb[0].mxu0
        %415 = vdwg.mxu0
        %417 = vrot.lane.b32.xlu0 %v410, 64
        %v418 = vpop.permute.xlu0 %417
        %vm419 = vcmask 261120
        %v420 = vsel %vm419, %v410, 0
        %v422 = vsel %vm419, %v418, 0
        %424 = vmatprep.subr.mxu0 0.0
        %425 = vmatpush1.xpose.msra.mxu0 %v422
        %426 = vmatprep.subr.mxu0 0.0
        %427 = vmatpush1.xpose.msra.mxu0 0.0
        %428 = vmatprep.subr.mxu0 0.0
        %429 = vmatpush1.xpose.msra.mxu0 0.0
        %430 = vmatprep.subr.mxu0 0.0
        %431 = vmatpush1.xpose.msra.mxu0 0.0
        %432 = vmatprep.subr.mxu0 0.0
        %433 = vmatpush1.xpose.msra.mxu0 0.0
        %434 = vmatprep.subr.mxu0 0.0
        %435 = vmatpush1.xpose.msra.mxu0 0.0
        %436 = vmatprep.subr.mxu0 0.0
        %437 = vmatpush1.xpose.msra.mxu0 0.0
        %438 = vmatprep.subr.mxu0 0.0
        %439 = vmatpush1.xpose.msra.mxu0 0.0
        %440 = vmatprep.subr.mxu0 0.0
        %441 = vmatpush1.xpose.msra.mxu0 0.0
        %442 = vmatprep.subr.mxu0 0.0
        %443 = vmatpush1.xpose.msra.mxu0 0.0
        %444 = vmatprep.subr.mxu0 0.0
        %445 = vmatpush1.xpose.msra.mxu0 0.0
        %446 = vmatprep.subr.mxu0 0.0
        %447 = vmatpush1.xpose.msra.mxu0 0.0
        %448 = vmatprep.subr.mxu0 0.0
        %449 = vmatpush1.xpose.msra.mxu0 0.0
        %450 = vmatprep.subr.mxu0 0.0
        %451 = vmatpush1.xpose.msra.mxu0 0.0
        %452 = vmatprep.subr.mxu0 0.0
        %453 = vmatpush1.xpose.msra.mxu0 0.0
        %454 = vmatprep.subr.mxu0 0.0
        %455 = vmatpush1.xpose.msra.mxu0 0.0
        %456 = vmatprep.subr.mxu0 0.0
        %457 = vmatpush1.xpose.msra.mxu0 0.0
        %458 = vmatprep.subr.mxu0 0.0
        %459 = vmatpush1.xpose.msra.mxu0 0.0
        %460 = vmatprep.subr.mxu0 0.0
        %461 = vmatpush1.xpose.msra.mxu0 0.0
        %462 = vmatprep.subr.mxu0 0.0
        %463 = vmatpush1.xpose.msra.mxu0 0.0
        %464 = vmatprep.subr.mxu0 0.0
        %465 = vmatpush1.xpose.msra.mxu0 0.0
        %466 = vmatprep.subr.mxu0 0.0
        %467 = vmatpush1.xpose.msra.mxu0 0.0
        %468 = vmatprep.subr.mxu0 0.0
        %469 = vmatpush1.xpose.msra.mxu0 0.0
        %470 = vmatprep.subr.mxu0 0.0
        %471 = vmatpush1.xpose.msra.mxu0 0.0
        %472 = vmatprep.subr.mxu0 0.0
        %473 = vmatpush1.xpose.msra.mxu0 0.0
        %474 = vmatprep.subr.mxu0 0.0
        %475 = vmatpush1.xpose.msra.mxu0 0.0
        %476 = vmatprep.subr.mxu0 0.0
        %477 = vmatpush1.xpose.msra.mxu0 0.0
        %478 = vmatprep.subr.mxu0 0.0
        %479 = vmatpush1.xpose.msra.mxu0 0.0
        %480 = vmatprep.subr.mxu0 0.0
        %481 = vmatpush1.xpose.msra.mxu0 0.0
        %482 = vmatprep.subr.mxu0 0.0
        %483 = vmatpush1.xpose.msra.mxu0 0.0
        %484 = vmatprep.subr.mxu0 0.0
        %485 = vmatpush1.xpose.msra.mxu0 0.0
        %486 = vmatprep.subr.mxu0 0.0
        %487 = vmatpush1.xpose.msra.mxu0 0.0
        %488 = vmatprep.mubr.f32.mxu0 0.0
        %489 = vmatmul.mubr.f32.gmra.mrb[0].mxu0 %v420
        %v490 = vpop.f32.mrb[0].mxu0
        %v491 = vadd.f32 0.0, %v490
        %v492 = vpop.f32.mrb[0].mxu0
        %493 = vdwg.mxu0
        %vm494 = vcmask 64512
        %v495 = vsel %vm494, %v491, -inf
        %496 = vmax.xlane.f32.xlu0 %v495
        %v497 = vpop.xlane.xlu0 %496
        %v498 = vsub.f32 %v491, %v497
        %v499 = vmul.f32 %v498, 1.442695
        %v500 = vpow.pop %v499
        %v501 = vsel %vm494, %v500, 0.0
        %502 = vadd.xlane.f32.xlu0 %v501
        %v503 = vpop.xlane.xlu0 %502
        %v504 = vrcp.pop %v503
        %v505 = vmul.f32 %v500, %v504
        %v507 = vsel %vm494, %v505, 0
        %509 = vmatprep.subr.mxu0 0.0
        %510 = vmatpush1.msra.mxu0 %v412
        %511 = vmatprep.subr.mxu0 0.0
        %512 = vmatpush1.msra.mxu0 0.0
        %513 = vmatprep.subr.mxu0 0.0
        %514 = vmatpush1.msra.mxu0 0.0
        %515 = vmatprep.subr.mxu0 0.0
        %516 = vmatpush1.msra.mxu0 0.0
        %517 = vmatprep.subr.mxu0 0.0
        %518 = vmatpush1.msra.mxu0 0.0
        %519 = vmatprep.subr.mxu0 0.0
        %520 = vmatpush1.msra.mxu0 0.0
        %521 = vmatprep.subr.mxu0 0.0
        %522 = vmatpush1.msra.mxu0 0.0
        %523 = vmatprep.subr.mxu0 0.0
        %524 = vmatpush1.msra.mxu0 0.0
        %525 = vmatprep.subr.mxu0 0.0
        %526 = vmatpush1.msra.mxu0 0.0
        %527 = vmatprep.subr.mxu0 0.0
        %528 = vmatpush1.msra.mxu0 0.0
        %529 = vmatprep.subr.mxu0 0.0
        %530 = vmatpush1.msra.mxu0 0.0
        %531 = vmatprep.subr.mxu0 0.0
        %532 = vmatpush1.msra.mxu0 0.0
        %533 = vmatprep.subr.mxu0 0.0
        %534 = vmatpush1.msra.mxu0 0.0
        %535 = vmatprep.subr.mxu0 0.0
        %536 = vmatpush1.msra.mxu0 0.0
        %537 = vmatprep.subr.mxu0 0.0
        %538 = vmatpush1.msra.mxu0 0.0
        %539 = vmatprep.subr.mxu0 0.0
        %540 = vmatpush1.msra.mxu0 0.0
        %541 = vmatprep.subr.mxu0 0.0
        %542 = vmatpush1.msra.mxu0 0.0
        %543 = vmatprep.subr.mxu0 0.0
        %544 = vmatpush1.msra.mxu0 0.0
        %545 = vmatprep.subr.mxu0 0.0
        %546 = vmatpush1.msra.mxu0 0.0
        %547 = vmatprep.subr.mxu0 0.0
        %548 = vmatpush1.msra.mxu0 0.0
        %549 = vmatprep.subr.mxu0 0.0
        %550 = vmatpush1.msra.mxu0 0.0
        %551 = vmatprep.subr.mxu0 0.0
        %552 = vmatpush1.msra.mxu0 0.0
        %553 = vmatprep.subr.mxu0 0.0
        %554 = vmatpush1.msra.mxu0 0.0
        %555 = vmatprep.subr.mxu0 0.0
        %556 = vmatpush1.msra.mxu0 0.0
        %557 = vmatprep.subr.mxu0 0.0
        %558 = vmatpush1.msra.mxu0 0.0
        %559 = vmatprep.subr.mxu0 0.0
        %560 = vmatpush1.msra.mxu0 0.0
        %561 = vmatprep.subr.mxu0 0.0
        %562 = vmatpush1.msra.mxu0 0.0
        %563 = vmatprep.subr.mxu0 0.0
        %564 = vmatpush1.msra.mxu0 0.0
        %565 = vmatprep.subr.mxu0 0.0
        %566 = vmatpush1.msra.mxu0 0.0
        %567 = vmatprep.subr.mxu0 0.0
        %568 = vmatpush1.msra.mxu0 0.0
        %569 = vmatprep.subr.mxu0 0.0
        %570 = vmatpush1.msra.mxu0 0.0
        %571 = vmatprep.subr.mxu0 0.0
        %572 = vmatpush1.msra.mxu0 0.0
        %573 = vmatprep.mubr.f32.mxu0 0.0
        %574 = vmatmul.mubr.f32.gmra.mrb[0].mxu0 %v507
        %v575 = vpop.f32.mrb[0].mxu0
        %v576 = vadd.f32 0.0, %v575
        %v577 = vpop.f32.mrb[0].mxu0
        %578 = vdwg.mxu0
        %579 = vst.msk [vmem:[#allocation2] sm:$0xff] %vm419, %v576
        %580 = vrot.lane.b32.xlu0 %v410, 96
        %v581 = vpop.permute.xlu0 %580
        %582 = vrot.lane.b32.xlu0 %v410, 32
        %v583 = vpop.permute.xlu0 %582
        %v584 = vsel %vm419, %v581, 0
        %v586 = vsel %vm419, %v583, 0
        %588 = vmatprep.subr.mxu0 0.0
        %589 = vmatpush1.xpose.msra.mxu0 %v586
        %590 = vmatprep.subr.mxu0 0.0
        %591 = vmatpush1.xpose.msra.mxu0 0.0
        %592 = vmatprep.subr.mxu0 0.0
        %593 = vmatpush1.xpose.msra.mxu0 0.0
        %594 = vmatprep.subr.mxu0 0.0
        %595 = vmatpush1.xpose.msra.mxu0 0.0
        %596 = vmatprep.subr.mxu0 0.0
        %597 = vmatpush1.xpose.msra.mxu0 0.0
        %598 = vmatprep.subr.mxu0 0.0
        %599 = vmatpush1.xpose.msra.mxu0 0.0
        %600 = vmatprep.subr.mxu0 0.0
        %601 = vmatpush1.xpose.msra.mxu0 0.0
        %602 = vmatprep.subr.mxu0 0.0
        %603 = vmatpush1.xpose.msra.mxu0 0.0
        %604 = vmatprep.subr.mxu0 0.0
        %605 = vmatpush1.xpose.msra.mxu0 0.0
        %606 = vmatprep.subr.mxu0 0.0
        %607 = vmatpush1.xpose.msra.mxu0 0.0
        %608 = vmatprep.subr.mxu0 0.0
        %609 = vmatpush1.xpose.msra.mxu0 0.0
        %610 = vmatprep.subr.mxu0 0.0
        %611 = vmatpush1.xpose.msra.mxu0 0.0
        %612 = vmatprep.subr.mxu0 0.0
        %613 = vmatpush1.xpose.msra.mxu0 0.0
        %614 = vmatprep.subr.mxu0 0.0
        %615 = vmatpush1.xpose.msra.mxu0 0.0
        %616 = vmatprep.subr.mxu0 0.0
        %617 = vmatpush1.xpose.msra.mxu0 0.0
        %618 = vmatprep.subr.mxu0 0.0
        %619 = vmatpush1.xpose.msra.mxu0 0.0
        %620 = vmatprep.subr.mxu0 0.0
        %621 = vmatpush1.xpose.msra.mxu0 0.0
        %622 = vmatprep.subr.mxu0 0.0
        %623 = vmatpush1.xpose.msra.mxu0 0.0
        %624 = vmatprep.subr.mxu0 0.0
        %625 = vmatpush1.xpose.msra.mxu0 0.0
        %626 = vmatprep.subr.mxu0 0.0
        %627 = vmatpush1.xpose.msra.mxu0 0.0
        %628 = vmatprep.subr.mxu0 0.0
        %629 = vmatpush1.xpose.msra.mxu0 0.0
        %630 = vmatprep.subr.mxu0 0.0
        %631 = vmatpush1.xpose.msra.mxu0 0.0
        %632 = vmatprep.subr.mxu0 0.0
        %633 = vmatpush1.xpose.msra.mxu0 0.0
        %634 = vmatprep.subr.mxu0 0.0
        %635 = vmatpush1.xpose.msra.mxu0 0.0
        %636 = vmatprep.subr.mxu0 0.0
        %637 = vmatpush1.xpose.msra.mxu0 0.0
        %638 = vmatprep.subr.mxu0 0.0
        %639 = vmatpush1.xpose.msra.mxu0 0.0
        %640 = vmatprep.subr.mxu0 0.0
        %641 = vmatpush1.xpose.msra.mxu0 0.0
        %642 = vmatprep.subr.mxu0 0.0
        %643 = vmatpush1.xpose.msra.mxu0 0.0
        %644 = vmatprep.subr.mxu0 0.0
        %645 = vmatpush1.xpose.msra.mxu0 0.0
        %646 = vmatprep.subr.mxu0 0.0
        %647 = vmatpush1.xpose.msra.mxu0 0.0
        %648 = vmatprep.subr.mxu0 0.0
        %649 = vmatpush1.xpose.msra.mxu0 0.0
        %650 = vmatprep.subr.mxu0 0.0
        %651 = vmatpush1.xpose.msra.mxu0 0.0
        %652 = vmatprep.mubr.f32.mxu0 0.0
        %653 = vmatmul.mubr.f32.gmra.mrb[0].mxu0 %v584
        %v654 = vpop.f32.mrb[0].mxu0
        %v655 = vadd.f32 0.0, %v654
        %v656 = vpop.f32.mrb[0].mxu0
        %657 = vdwg.mxu0
        %v658 = vsel %vm494, %v655, -inf
        %659 = vmax.xlane.f32.xlu0 %v658
        %v660 = vpop.xlane.xlu0 %659
        %v661 = vsub.f32 %v655, %v660
        %v662 = vmul.f32 %v661, 1.442695
        %v663 = vpow.pop %v662
        %v664 = vsel %vm494, %v663, 0.0
        %665 = vadd.xlane.f32.xlu0 %v664
        %v666 = vpop.xlane.xlu0 %665
        %v667 = vrcp.pop %v666
        %v668 = vmul.f32 %v663, %v667
        %670 = vrot.lane.b32.xlu0 %v412, 96
        %v671 = vpop.permute.xlu0 %670
        %v674 = vsel %vm494, %v668, 0
        %676 = vmatprep.subr.mxu0 0.0
        %677 = vmatpush1.msra.mxu0 %v671
        %678 = vmatprep.subr.mxu0 0.0
        %679 = vmatpush1.msra.mxu0 0.0
        %680 = vmatprep.subr.mxu0 0.0
        %681 = vmatpush1.msra.mxu0 0.0
        %682 = vmatprep.subr.mxu0 0.0
        %683 = vmatpush1.msra.mxu0 0.0
        %684 = vmatprep.subr.mxu0 0.0
        %685 = vmatpush1.msra.mxu0 0.0
        %686 = vmatprep.subr.mxu0 0.0
        %687 = vmatpush1.msra.mxu0 0.0
        %688 = vmatprep.subr.mxu0 0.0
        %689 = vmatpush1.msra.mxu0 0.0
        %690 = vmatprep.subr.mxu0 0.0
        %691 = vmatpush1.msra.mxu0 0.0
        %692 = vmatprep.subr.mxu0 0.0
        %693 = vmatpush1.msra.mxu0 0.0
        %694 = vmatprep.subr.mxu0 0.0
        %695 = vmatpush1.msra.mxu0 0.0
        %696 = vmatprep.subr.mxu0 0.0
        %697 = vmatpush1.msra.mxu0 0.0
        %698 = vmatprep.subr.mxu0 0.0
        %699 = vmatpush1.msra.mxu0 0.0
        %700 = vmatprep.subr.mxu0 0.0
        %701 = vmatpush1.msra.mxu0 0.0
        %702 = vmatprep.subr.mxu0 0.0
        %703 = vmatpush1.msra.mxu0 0.0
        %704 = vmatprep.subr.mxu0 0.0
        %705 = vmatpush1.msra.mxu0 0.0
        %706 = vmatprep.subr.mxu0 0.0
        %707 = vmatpush1.msra.mxu0 0.0
        %708 = vmatprep.subr.mxu0 0.0
        %709 = vmatpush1.msra.mxu0 0.0
        %710 = vmatprep.subr.mxu0 0.0
        %711 = vmatpush1.msra.mxu0 0.0
        %712 = vmatprep.subr.mxu0 0.0
        %713 = vmatpush1.msra.mxu0 0.0
        %714 = vmatprep.subr.mxu0 0.0
        %715 = vmatpush1.msra.mxu0 0.0
        %716 = vmatprep.subr.mxu0 0.0
        %717 = vmatpush1.msra.mxu0 0.0
        %718 = vmatprep.subr.mxu0 0.0
        %719 = vmatpush1.msra.mxu0 0.0
        %720 = vmatprep.subr.mxu0 0.0
        %721 = vmatpush1.msra.mxu0 0.0
        %722 = vmatprep.subr.mxu0 0.0
        %723 = vmatpush1.msra.mxu0 0.0
        %724 = vmatprep.subr.mxu0 0.0
        %725 = vmatpush1.msra.mxu0 0.0
        %726 = vmatprep.subr.mxu0 0.0
        %727 = vmatpush1.msra.mxu0 0.0
        %728 = vmatprep.subr.mxu0 0.0
        %729 = vmatpush1.msra.mxu0 0.0
        %730 = vmatprep.subr.mxu0 0.0
        %731 = vmatpush1.msra.mxu0 0.0
        %732 = vmatprep.subr.mxu0 0.0
        %733 = vmatpush1.msra.mxu0 0.0
        %734 = vmatprep.subr.mxu0 0.0
        %735 = vmatpush1.msra.mxu0 0.0
        %736 = vmatprep.subr.mxu0 0.0
        %737 = vmatpush1.msra.mxu0 0.0
        %738 = vmatprep.subr.mxu0 0.0
        %739 = vmatpush1.msra.mxu0 0.0
        %740 = vmatprep.mubr.f32.mxu0 0.0
        %741 = vmatmul.mubr.f32.gmra.mrb[0].mxu0 %v674
        %v742 = vpop.f32.mrb[0].mxu0
        %v743 = vadd.f32 0.0, %v742
        %v744 = vpop.f32.mrb[0].mxu0
        %745 = vdwg.mxu0
        %747 = vrot.lane.b32.xlu0 %v743, 32
        %v748 = vpop.permute.xlu0 %747
        %vm750 = vcmask 523520
        %751 = vst.msk [vmem:[#allocation2] sm:$0xff] %vm750, %v748
        %v752 = vld [vmem:[#allocation2] sm:$0xff]
        %v753 = vpack.c.bf16 %v752, %v752
        %v754 = vld [vmem:[#allocation8] sm:$0xf]
        %v755 = vld [vmem:[#allocation8 + $0x4] sm:$0xf]
        %v756 = vld [vmem:[#allocation8 + $0x8] sm:$0xf]
        %v757 = vld [vmem:[#allocation8 + $0xc] sm:$0xf]
        %v758 = vld [vmem:[#allocation8 + $0x10] sm:$0xf]
        %v759 = vld [vmem:[#allocation8 + $0x14] sm:$0xf]
        %v760 = vld [vmem:[#allocation8 + $0x18] sm:$0xf]
        %v761 = vld [vmem:[#allocation8 + $0x1c] sm:$0xf]
        %v762 = vld [vmem:[%s4] sm:$0x1]
        %v764 = vlaneseq
        %v765 = vshrl.u32 %v764, 7
        %v766 = vsub.s32 0, %v765
        %v767 = vrot.slane %v762, %v766
        %v777 = vunpack.c.l.b16 %v754
        %v778 = vunpack.c.l.b16 %v755
        %v779 = vunpack.c.l.b16 %v756
        %v780 = vunpack.c.l.b16 %v757
        %v781 = vunpack.c.l.b16 %v758
        %v782 = vunpack.c.l.b16 %v759
        %v783 = vunpack.c.l.b16 %v760
        %v784 = vunpack.c.l.b16 %v761
        %v785 = vpack.c.b16 %v778, %v777
        %v786 = vpack.c.b16 %v780, %v779
        %v787 = vpack.c.b16 %v782, %v781
        %v788 = vpack.c.b16 %v784, %v783
        %v794 = vsel %vm371, %v753, 0
        %796 = vmatprep.subr.bf16.mxu0 0
        %797 = vmatpush1.bf16.msra.mxu0 %v785
        %798 = vmatprep.subr.bf16.mxu0 0
        %799 = vmatpush1.bf16.msra.mxu0 %v786
        %800 = vmatprep.subr.bf16.mxu0 0
        %801 = vmatpush1.bf16.msra.mxu0 %v787
        %802 = vmatprep.subr.bf16.mxu0 0
        %803 = vmatpush1.bf16.msra.mxu0 %v788
        %804 = vmatprep.subr.bf16.mxu0 0
        %805 = vmatpush1.bf16.msra.mxu0 0
        %806 = vmatprep.subr.bf16.mxu0 0
        %807 = vmatpush1.bf16.msra.mxu0 0
        %808 = vmatprep.subr.bf16.mxu0 0
        %809 = vmatpush1.bf16.msra.mxu0 0
        %810 = vmatprep.subr.bf16.mxu0 0
        %811 = vmatpush1.bf16.msra.mxu0 0
        %812 = vmatprep.subr.bf16.mxu0 0
        %813 = vmatpush1.bf16.msra.mxu0 0
        %814 = vmatprep.subr.bf16.mxu0 0
        %815 = vmatpush1.bf16.msra.mxu0 0
        %816 = vmatprep.subr.bf16.mxu0 0
        %817 = vmatpush1.bf16.msra.mxu0 0
        %818 = vmatprep.subr.bf16.mxu0 0
        %819 = vmatpush1.bf16.msra.mxu0 0
        %820 = vmatprep.subr.bf16.mxu0 0
        %821 = vmatpush1.bf16.msra.mxu0 0
        %822 = vmatprep.subr.bf16.mxu0 0
        %823 = vmatpush1.bf16.msra.mxu0 0
        %824 = vmatprep.subr.bf16.mxu0 0
        %825 = vmatpush1.bf16.msra.mxu0 0
        %826 = vmatprep.subr.bf16.mxu0 0
        %827 = vmatpush1.bf16.msra.mxu0 0
        %828 = vmatprep.mubr.bf16.mxu0 0
        %829 = vmatmul.mubr.bf16.gmra.mrb[0].mxu0 %v794
        %v830 = vpop.f32.mrb[0].mxu0
        %v831 = vadd.f32 %v767, %v830
        %v832 = vpop.f32.mrb[0].mxu0
        %v833 = vpop.f32.mrb[0].mxu0
        %v834 = vpop.f32.mrb[0].mxu0
        %835 = vdwg.mxu0
        %837 = vrot.lane.b32.xlu0 %v831, 64
        %v838 = vpop.permute.xlu0 %837
        %vm840 = vcmask 1044996
        %841 = vst.msk [vmem:[%s305 - $0x4] sm:$0x10] %vm840, %v838
        %v842 = vpack.c.bf16 %v831, %v831
        %v843 = vld [vmem:[#allocation6] sm:$0xff]
        %v844 = vld [vmem:[#allocation6 + $0x8] sm:$0xff]
        %v845 = vld [vmem:[#allocation6 + $0x10] sm:$0xff]
        %v846 = vld [vmem:[#allocation6 + $0x18] sm:$0xff]
        %v847 = vld [vmem:[#allocation6 + $0x20] sm:$0xff]
        %v848 = vld [vmem:[#allocation6 + $0x28] sm:$0xff]
        %v849 = vld [vmem:[#allocation6 + $0x30] sm:$0xff]
        %v850 = vld [vmem:[#allocation6 + $0x38] sm:$0xff]
        %v851 = vld [vmem:[%s2] sm:$0x3]
        %v853 = vlaneseq
        %v854 = vshrl.u32 %v853, 7
        %v855 = vsub.s32 0, %v854
        %v856 = vrot.slane %v851, %v855
        %v857 = vlaneseq
        %v858 = vshrl.u32 %v857, 7
        %v859 = vsub.s32 1, %v858
        %v860 = vrot.slane %v851, %v859
        %v871 = vunpack.c.l.b16 %v843
        %v872 = vunpack.c.h.b16 %v843
        %v873 = vunpack.c.l.b16 %v844
        %v874 = vunpack.c.h.b16 %v844
        %v875 = vunpack.c.l.b16 %v845
        %v876 = vunpack.c.h.b16 %v845
        %v877 = vunpack.c.l.b16 %v846
        %v878 = vunpack.c.h.b16 %v846
        %v879 = vunpack.c.l.b16 %v847
        %v880 = vunpack.c.h.b16 %v847
        %v881 = vunpack.c.l.b16 %v848
        %v882 = vunpack.c.h.b16 %v848
        %v883 = vunpack.c.l.b16 %v849
        %v884 = vunpack.c.h.b16 %v849
        %v885 = vunpack.c.l.b16 %v850
        %v886 = vunpack.c.h.b16 %v850
        %v887 = vpack.c.b16 %v873, %v871
        %v888 = vpack.c.b16 %v874, %v872
        %v889 = vpack.c.b16 %v877, %v875
        %v890 = vpack.c.b16 %v878, %v876
        %v891 = vpack.c.b16 %v881, %v879
        %v892 = vpack.c.b16 %v882, %v880
        %v893 = vpack.c.b16 %v885, %v883
        %v894 = vpack.c.b16 %v886, %v884
        %v904 = vsel %vm371, %v842, 0
        %906 = vmatprep.subr.bf16.mxu0 %v888
        %907 = vmatpush1.bf16.msra.mxu0 %v887
        %908 = vmatprep.subr.bf16.mxu0 %v890
        %909 = vmatpush1.bf16.msra.mxu0 %v889
        %910 = vmatprep.subr.bf16.mxu0 %v892
        %911 = vmatpush1.bf16.msra.mxu0 %v891
        %912 = vmatprep.subr.bf16.mxu0 %v894
        %913 = vmatpush1.bf16.msra.mxu0 %v893
        %914 = vmatprep.subr.bf16.mxu0 0
        %915 = vmatpush1.bf16.msra.mxu0 0
        %916 = vmatprep.subr.bf16.mxu0 0
        %917 = vmatpush1.bf16.msra.mxu0 0
        %918 = vmatprep.subr.bf16.mxu0 0
        %919 = vmatpush1.bf16.msra.mxu0 0
        %920 = vmatprep.subr.bf16.mxu0 0
        %921 = vmatpush1.bf16.msra.mxu0 0
        %922 = vmatprep.subr.bf16.mxu0 0
        %923 = vmatpush1.bf16.msra.mxu0 0
        %924 = vmatprep.subr.bf16.mxu0 0
        %925 = vmatpush1.bf16.msra.mxu0 0
        %926 = vmatprep.subr.bf16.mxu0 0
        %927 = vmatpush1.bf16.msra.mxu0 0
        %928 = vmatprep.subr.bf16.mxu0 0
        %929 = vmatpush1.bf16.msra.mxu0 0
        %930 = vmatprep.subr.bf16.mxu0 0
        %931 = vmatpush1.bf16.msra.mxu0 0
        %932 = vmatprep.subr.bf16.mxu0 0
        %933 = vmatpush1.bf16.msra.mxu0 0
        %934 = vmatprep.subr.bf16.mxu0 0
        %935 = vmatpush1.bf16.msra.mxu0 0
        %936 = vmatprep.subr.bf16.mxu0 0
        %937 = vmatpush1.bf16.msra.mxu0 0
        %938 = vmatprep.mubr.bf16.mxu0 0
        %939 = vmatmul.mubr.bf16.gmra.mrb[0].mxu0 %v904
        %v940 = vpop.f32.mrb[0].mxu0
        %v941 = vadd.f32 %v856, %v940
        %v942 = vpop.f32.mrb[0].mxu0
        %v943 = vadd.f32 %v860, %v942
        %v944 = vpop.f32.mrb[0].mxu0
        %v945 = vpop.f32.mrb[0].mxu0
        %946 = vdwg.mxu0
        %948 = vrot.lane.b32.xlu0 %v941, 64
        %v949 = vpop.permute.xlu0 %948
        %v950 = vsel %vm419, %v941, 0
        %v952 = vsel %vm419, %v949, 0
        %954 = vmatprep.subr.mxu0 0.0
        %955 = vmatpush1.xpose.msra.mxu0 %v952
        %956 = vmatprep.subr.mxu0 0.0
        %957 = vmatpush1.xpose.msra.mxu0 0.0
        %958 = vmatprep.subr.mxu0 0.0
        %959 = vmatpush1.xpose.msra.mxu0 0.0
        %960 = vmatprep.subr.mxu0 0.0
        %961 = vmatpush1.xpose.msra.mxu0 0.0
        %962 = vmatprep.subr.mxu0 0.0
        %963 = vmatpush1.xpose.msra.mxu0 0.0
        %964 = vmatprep.subr.mxu0 0.0
        %965 = vmatpush1.xpose.msra.mxu0 0.0
        %966 = vmatprep.subr.mxu0 0.0
        %967 = vmatpush1.xpose.msra.mxu0 0.0
        %968 = vmatprep.subr.mxu0 0.0
        %969 = vmatpush1.xpose.msra.mxu0 0.0
        %970 = vmatprep.subr.mxu0 0.0
        %971 = vmatpush1.xpose.msra.mxu0 0.0
        %972 = vmatprep.subr.mxu0 0.0
        %973 = vmatpush1.xpose.msra.mxu0 0.0
        %974 = vmatprep.subr.mxu0 0.0
        %975 = vmatpush1.xpose.msra.mxu0 0.0
        %976 = vmatprep.subr.mxu0 0.0
        %977 = vmatpush1.xpose.msra.mxu0 0.0
        %978 = vmatprep.subr.mxu0 0.0
        %979 = vmatpush1.xpose.msra.mxu0 0.0
        %980 = vmatprep.subr.mxu0 0.0
        %981 = vmatpush1.xpose.msra.mxu0 0.0
        %982 = vmatprep.subr.mxu0 0.0
        %983 = vmatpush1.xpose.msra.mxu0 0.0
        %984 = vmatprep.subr.mxu0 0.0
        %985 = vmatpush1.xpose.msra.mxu0 0.0
        %986 = vmatprep.subr.mxu0 0.0
        %987 = vmatpush1.xpose.msra.mxu0 0.0
        %988 = vmatprep.subr.mxu0 0.0
        %989 = vmatpush1.xpose.msra.mxu0 0.0
        %990 = vmatprep.subr.mxu0 0.0
        %991 = vmatpush1.xpose.msra.mxu0 0.0
        %992 = vmatprep.subr.mxu0 0.0
        %993 = vmatpush1.xpose.msra.mxu0 0.0
        %994 = vmatprep.subr.mxu0 0.0
        %995 = vmatpush1.xpose.msra.mxu0 0.0
        %996 = vmatprep.subr.mxu0 0.0
        %997 = vmatpush1.xpose.msra.mxu0 0.0
        %998 = vmatprep.subr.mxu0 0.0
        %999 = vmatpush1.xpose.msra.mxu0 0.0
        %1000 = vmatprep.subr.mxu0 0.0
        %1001 = vmatpush1.xpose.msra.mxu0 0.0
        %1002 = vmatprep.subr.mxu0 0.0
        %1003 = vmatpush1.xpose.msra.mxu0 0.0
        %1004 = vmatprep.subr.mxu0 0.0
        %1005 = vmatpush1.xpose.msra.mxu0 0.0
        %1006 = vmatprep.subr.mxu0 0.0
        %1007 = vmatpush1.xpose.msra.mxu0 0.0
        %1008 = vmatprep.subr.mxu0 0.0
        %1009 = vmatpush1.xpose.msra.mxu0 0.0
        %1010 = vmatprep.subr.mxu0 0.0
        %1011 = vmatpush1.xpose.msra.mxu0 0.0
        %1012 = vmatprep.subr.mxu0 0.0
        %1013 = vmatpush1.xpose.msra.mxu0 0.0
        %1014 = vmatprep.subr.mxu0 0.0
        %1015 = vmatpush1.xpose.msra.mxu0 0.0
        %1016 = vmatprep.subr.mxu0 0.0
        %1017 = vmatpush1.xpose.msra.mxu0 0.0
        %1018 = vmatprep.mubr.f32.mxu0 0.0
        %1019 = vmatmul.mubr.f32.gmra.mrb[0].mxu0 %v950
        %v1020 = vpop.f32.mrb[0].mxu0
        %v1021 = vadd.f32 0.0, %v1020
        %v1022 = vpop.f32.mrb[0].mxu0
        %1023 = vdwg.mxu0
        %v1024 = vsel %vm494, %v1021, -inf
        %1025 = vmax.xlane.f32.xlu0 %v1024
        %v1026 = vpop.xlane.xlu0 %1025
        %v1027 = vsub.f32 %v1021, %v1026
        %v1028 = vmul.f32 %v1027, 1.442695
        %v1029 = vpow.pop %v1028
        %v1030 = vsel %vm494, %v1029, 0.0
        %1031 = vadd.xlane.f32.xlu0 %v1030
        %v1032 = vpop.xlane.xlu0 %1031
        %v1033 = vrcp.pop %v1032
        %v1034 = vmul.f32 %v1029, %v1033
        %v1036 = vsel %vm494, %v1034, 0
        %1038 = vmatprep.subr.mxu0 0.0
        %1039 = vmatpush1.msra.mxu0 %v943
        %1040 = vmatprep.subr.mxu0 0.0
        %1041 = vmatpush1.msra.mxu0 0.0
        %1042 = vmatprep.subr.mxu0 0.0
        %1043 = vmatpush1.msra.mxu0 0.0
        %1044 = vmatprep.subr.mxu0 0.0
        %1045 = vmatpush1.msra.mxu0 0.0
        %1046 = vmatprep.subr.mxu0 0.0
        %1047 = vmatpush1.msra.mxu0 0.0
        %1048 = vmatprep.subr.mxu0 0.0
        %1049 = vmatpush1.msra.mxu0 0.0
        %1050 = vmatprep.subr.mxu0 0.0
        %1051 = vmatpush1.msra.mxu0 0.0
        %1052 = vmatprep.subr.mxu0 0.0
        %1053 = vmatpush1.msra.mxu0 0.0
        %1054 = vmatprep.subr.mxu0 0.0
        %1055 = vmatpush1.msra.mxu0 0.0
        %1056 = vmatprep.subr.mxu0 0.0
        %1057 = vmatpush1.msra.mxu0 0.0
        %1058 = vmatprep.subr.mxu0 0.0
        %1059 = vmatpush1.msra.mxu0 0.0
        %1060 = vmatprep.subr.mxu0 0.0
        %1061 = vmatpush1.msra.mxu0 0.0
        %1062 = vmatprep.subr.mxu0 0.0
        %1063 = vmatpush1.msra.mxu0 0.0
        %1064 = vmatprep.subr.mxu0 0.0
        %1065 = vmatpush1.msra.mxu0 0.0
        %1066 = vmatprep.subr.mxu0 0.0
        %1067 = vmatpush1.msra.mxu0 0.0
        %1068 = vmatprep.subr.mxu0 0.0
        %1069 = vmatpush1.msra.mxu0 0.0
        %1070 = vmatprep.subr.mxu0 0.0
        %1071 = vmatpush1.msra.mxu0 0.0
        %1072 = vmatprep.subr.mxu0 0.0
        %1073 = vmatpush1.msra.mxu0 0.0
        %1074 = vmatprep.subr.mxu0 0.0
        %1075 = vmatpush1.msra.mxu0 0.0
        %1076 = vmatprep.subr.mxu0 0.0
        %1077 = vmatpush1.msra.mxu0 0.0
        %1078 = vmatprep.subr.mxu0 0.0
        %1079 = vmatpush1.msra.mxu0 0.0
        %1080 = vmatprep.subr.mxu0 0.0
        %1081 = vmatpush1.msra.mxu0 0.0
        %1082 = vmatprep.subr.mxu0 0.0
        %1083 = vmatpush1.msra.mxu0 0.0
        %1084 = vmatprep.subr.mxu0 0.0
        %1085 = vmatpush1.msra.mxu0 0.0
        %1086 = vmatprep.subr.mxu0 0.0
        %1087 = vmatpush1.msra.mxu0 0.0
        %1088 = vmatprep.subr.mxu0 0.0
        %1089 = vmatpush1.msra.mxu0 0.0
        %1090 = vmatprep.subr.mxu0 0.0
        %1091 = vmatpush1.msra.mxu0 0.0
        %1092 = vmatprep.subr.mxu0 0.0
        %1093 = vmatpush1.msra.mxu0 0.0
        %1094 = vmatprep.subr.mxu0 0.0
        %1095 = vmatpush1.msra.mxu0 0.0
        %1096 = vmatprep.subr.mxu0 0.0
        %1097 = vmatpush1.msra.mxu0 0.0
        %1098 = vmatprep.subr.mxu0 0.0
        %1099 = vmatpush1.msra.mxu0 0.0
        %1100 = vmatprep.subr.mxu0 0.0
        %1101 = vmatpush1.msra.mxu0 0.0
        %1102 = vmatprep.mubr.f32.mxu0 0.0
        %1103 = vmatmul.mubr.f32.gmra.mrb[0].mxu0 %v1036
        %v1104 = vpop.f32.mrb[0].mxu0
        %v1105 = vadd.f32 0.0, %v1104
        %v1106 = vpop.f32.mrb[0].mxu0
        %1107 = vdwg.mxu0
        %1108 = vst.msk [vmem:[#allocation2] sm:$0xff] %vm419, %v1105
        %1109 = vrot.lane.b32.xlu0 %v941, 96
        %v1110 = vpop.permute.xlu0 %1109
        %1111 = vrot.lane.b32.xlu0 %v941, 32
        %v1112 = vpop.permute.xlu0 %1111
        %v1113 = vsel %vm419, %v1110, 0
        %v1115 = vsel %vm419, %v1112, 0
        %1117 = vmatprep.subr.mxu0 0.0
        %1118 = vmatpush1.xpose.msra.mxu0 %v1115
        %1119 = vmatprep.subr.mxu0 0.0
        %1120 = vmatpush1.xpose.msra.mxu0 0.0
        %1121 = vmatprep.subr.mxu0 0.0
        %1122 = vmatpush1.xpose.msra.mxu0 0.0
        %1123 = vmatprep.subr.mxu0 0.0
        %1124 = vmatpush1.xpose.msra.mxu0 0.0
        %1125 = vmatprep.subr.mxu0 0.0
        %1126 = vmatpush1.xpose.msra.mxu0 0.0
        %1127 = vmatprep.subr.mxu0 0.0
        %1128 = vmatpush1.xpose.msra.mxu0 0.0
        %1129 = vmatprep.subr.mxu0 0.0
        %1130 = vmatpush1.xpose.msra.mxu0 0.0
        %1131 = vmatprep.subr.mxu0 0.0
        %1132 = vmatpush1.xpose.msra.mxu0 0.0
        %1133 = vmatprep.subr.mxu0 0.0
        %1134 = vmatpush1.xpose.msra.mxu0 0.0
        %1135 = vmatprep.subr.mxu0 0.0
        %1136 = vmatpush1.xpose.msra.mxu0 0.0
        %1137 = vmatprep.subr.mxu0 0.0
        %1138 = vmatpush1.xpose.msra.mxu0 0.0
        %1139 = vmatprep.subr.mxu0 0.0
        %1140 = vmatpush1.xpose.msra.mxu0 0.0
        %1141 = vmatprep.subr.mxu0 0.0
        %1142 = vmatpush1.xpose.msra.mxu0 0.0
        %1143 = vmatprep.subr.mxu0 0.0
        %1144 = vmatpush1.xpose.msra.mxu0 0.0
        %1145 = vmatprep.subr.mxu0 0.0
        %1146 = vmatpush1.xpose.msra.mxu0 0.0
        %1147 = vmatprep.subr.mxu0 0.0
        %1148 = vmatpush1.xpose.msra.mxu0 0.0
        %1149 = vmatprep.subr.mxu0 0.0
        %1150 = vmatpush1.xpose.msra.mxu0 0.0
        %1151 = vmatprep.subr.mxu0 0.0
        %1152 = vmatpush1.xpose.msra.mxu0 0.0
        %1153 = vmatprep.subr.mxu0 0.0
        %1154 = vmatpush1.xpose.msra.mxu0 0.0
        %1155 = vmatprep.subr.mxu0 0.0
        %1156 = vmatpush1.xpose.msra.mxu0 0.0
        %1157 = vmatprep.subr.mxu0 0.0
        %1158 = vmatpush1.xpose.msra.mxu0 0.0
        %1159 = vmatprep.subr.mxu0 0.0
        %1160 = vmatpush1.xpose.msra.mxu0 0.0
        %1161 = vmatprep.subr.mxu0 0.0
        %1162 = vmatpush1.xpose.msra.mxu0 0.0
        %1163 = vmatprep.subr.mxu0 0.0
        %1164 = vmatpush1.xpose.msra.mxu0 0.0
        %1165 = vmatprep.subr.mxu0 0.0
        %1166 = vmatpush1.xpose.msra.mxu0 0.0
        %1167 = vmatprep.subr.mxu0 0.0
        %1168 = vmatpush1.xpose.msra.mxu0 0.0
        %1169 = vmatprep.subr.mxu0 0.0
        %1170 = vmatpush1.xpose.msra.mxu0 0.0
        %1171 = vmatprep.subr.mxu0 0.0
        %1172 = vmatpush1.xpose.msra.mxu0 0.0
        %1173 = vmatprep.subr.mxu0 0.0
        %1174 = vmatpush1.xpose.msra.mxu0 0.0
        %1175 = vmatprep.subr.mxu0 0.0
        %1176 = vmatpush1.xpose.msra.mxu0 0.0
        %1177 = vmatprep.subr.mxu0 0.0
        %1178 = vmatpush1.xpose.msra.mxu0 0.0
        %1179 = vmatprep.subr.mxu0 0.0
        %1180 = vmatpush1.xpose.msra.mxu0 0.0
        %1181 = vmatprep.mubr.f32.mxu0 0.0
        %1182 = vmatmul.mubr.f32.gmra.mrb[0].mxu0 %v1113
        %v1183 = vpop.f32.mrb[0].mxu0
        %v1184 = vadd.f32 0.0, %v1183
        %v1185 = vpop.f32.mrb[0].mxu0
        %1186 = vdwg.mxu0
        %v1187 = vsel %vm494, %v1184, -inf
        %1188 = vmax.xlane.f32.xlu0 %v1187
        %v1189 = vpop.xlane.xlu0 %1188
        %v1190 = vsub.f32 %v1184, %v1189
        %v1191 = vmul.f32 %v1190, 1.442695
        %v1192 = vpow.pop %v1191
        %v1193 = vsel %vm494, %v1192, 0.0
        %1194 = vadd.xlane.f32.xlu0 %v1193
        %v1195 = vpop.xlane.xlu0 %1194
        %v1196 = vrcp.pop %v1195
        %v1197 = vmul.f32 %v1192, %v1196
        %1199 = vrot.lane.b32.xlu0 %v943, 96
        %v1200 = vpop.permute.xlu0 %1199
        %v1203 = vsel %vm494, %v1197, 0
        %1205 = vmatprep.subr.mxu0 0.0
        %1206 = vmatpush1.msra.mxu0 %v1200
        %1207 = vmatprep.subr.mxu0 0.0
        %1208 = vmatpush1.msra.mxu0 0.0
        %1209 = vmatprep.subr.mxu0 0.0
        %1210 = vmatpush1.msra.mxu0 0.0
        %1211 = vmatprep.subr.mxu0 0.0
        %1212 = vmatpush1.msra.mxu0 0.0
        %1213 = vmatprep.subr.mxu0 0.0
        %1214 = vmatpush1.msra.mxu0 0.0
        %1215 = vmatprep.subr.mxu0 0.0
        %1216 = vmatpush1.msra.mxu0 0.0
        %1217 = vmatprep.subr.mxu0 0.0
        %1218 = vmatpush1.msra.mxu0 0.0
        %1219 = vmatprep.subr.mxu0 0.0
        %1220 = vmatpush1.msra.mxu0 0.0
        %1221 = vmatprep.subr.mxu0 0.0
        %1222 = vmatpush1.msra.mxu0 0.0
        %1223 = vmatprep.subr.mxu0 0.0
        %1224 = vmatpush1.msra.mxu0 0.0
        %1225 = vmatprep.subr.mxu0 0.0
        %1226 = vmatpush1.msra.mxu0 0.0
        %1227 = vmatprep.subr.mxu0 0.0
        %1228 = vmatpush1.msra.mxu0 0.0
        %1229 = vmatprep.subr.mxu0 0.0
        %1230 = vmatpush1.msra.mxu0 0.0
        %1231 = vmatprep.subr.mxu0 0.0
        %1232 = vmatpush1.msra.mxu0 0.0
        %1233 = vmatprep.subr.mxu0 0.0
        %1234 = vmatpush1.msra.mxu0 0.0
        %1235 = vmatprep.subr.mxu0 0.0
        %1236 = vmatpush1.msra.mxu0 0.0
        %1237 = vmatprep.subr.mxu0 0.0
        %1238 = vmatpush1.msra.mxu0 0.0
        %1239 = vmatprep.subr.mxu0 0.0
        %1240 = vmatpush1.msra.mxu0 0.0
        %1241 = vmatprep.subr.mxu0 0.0
        %1242 = vmatpush1.msra.mxu0 0.0
        %1243 = vmatprep.subr.mxu0 0.0
        %1244 = vmatpush1.msra.mxu0 0.0
        %1245 = vmatprep.subr.mxu0 0.0
        %1246 = vmatpush1.msra.mxu0 0.0
        %1247 = vmatprep.subr.mxu0 0.0
        %1248 = vmatpush1.msra.mxu0 0.0
        %1249 = vmatprep.subr.mxu0 0.0
        %1250 = vmatpush1.msra.mxu0 0.0
        %1251 = vmatprep.subr.mxu0 0.0
        %1252 = vmatpush1.msra.mxu0 0.0
        %1253 = vmatprep.subr.mxu0 0.0
        %1254 = vmatpush1.msra.mxu0 0.0
        %1255 = vmatprep.subr.mxu0 0.0
        %1256 = vmatpush1.msra.mxu0 0.0
        %1257 = vmatprep.subr.mxu0 0.0
        %1258 = vmatpush1.msra.mxu0 0.0
        %1259 = vmatprep.subr.mxu0 0.0
        %1260 = vmatpush1.msra.mxu0 0.0
        %1261 = vmatprep.subr.mxu0 0.0
        %1262 = vmatpush1.msra.mxu0 0.0
        %1263 = vmatprep.subr.mxu0 0.0
        %1264 = vmatpush1.msra.mxu0 0.0
        %1265 = vmatprep.subr.mxu0 0.0
        %1266 = vmatpush1.msra.mxu0 0.0
        %1267 = vmatprep.subr.mxu0 0.0
        %1268 = vmatpush1.msra.mxu0 0.0
        %1269 = vmatprep.mubr.f32.mxu0 0.0
        %1270 = vmatmul.mubr.f32.gmra.mrb[0].mxu0 %v1203
        %v1271 = vpop.f32.mrb[0].mxu0
        %v1272 = vadd.f32 0.0, %v1271
        %v1273 = vpop.f32.mrb[0].mxu0
        %1274 = vdwg.mxu0
        %1276 = vrot.lane.b32.xlu0 %v1272, 32
        %v1277 = vpop.permute.xlu0 %1276
        %1279 = vst.msk [vmem:[#allocation2] sm:$0xff] %vm750, %v1277
        %v1280 = vld [vmem:[#allocation2] sm:$0xff]
        %v1281 = vpack.c.bf16 %v1280, %v1280
        %v1282 = vld [vmem:[#allocation8] sm:$0xf]
        %v1283 = vld [vmem:[#allocation8 + $0x4] sm:$0xf]
        %v1284 = vld [vmem:[#allocation8 + $0x8] sm:$0xf]
        %v1285 = vld [vmem:[#allocation8 + $0xc] sm:$0xf]
        %v1286 = vld [vmem:[#allocation8 + $0x10] sm:$0xf]
        %v1287 = vld [vmem:[#allocation8 + $0x14] sm:$0xf]
        %v1288 = vld [vmem:[#allocation8 + $0x18] sm:$0xf]
        %v1289 = vld [vmem:[#allocation8 + $0x1c] sm:$0xf]
        %v1290 = vld [vmem:[%s4] sm:$0x1]
        %v1292 = vlaneseq
        %v1293 = vshrl.u32 %v1292, 7
        %v1294 = vsub.s32 0, %v1293
        %v1295 = vrot.slane %v1290, %v1294
        %v1305 = vunpack.c.l.b16 %v1282
        %v1306 = vunpack.c.l.b16 %v1283
        %v1307 = vunpack.c.l.b16 %v1284
        %v1308 = vunpack.c.l.b16 %v1285
        %v1309 = vunpack.c.l.b16 %v1286
        %v1310 = vunpack.c.l.b16 %v1287
        %v1311 = vunpack.c.l.b16 %v1288
        %v1312 = vunpack.c.l.b16 %v1289
        %v1313 = vpack.c.b16 %v1306, %v1305
        %v1314 = vpack.c.b16 %v1308, %v1307
        %v1315 = vpack.c.b16 %v1310, %v1309
        %v1316 = vpack.c.b16 %v1312, %v1311
        %v1322 = vsel %vm371, %v1281, 0
        %1324 = vmatprep.subr.bf16.mxu0 0
        %1325 = vmatpush1.bf16.msra.mxu0 %v1313
        %1326 = vmatprep.subr.bf16.mxu0 0
        %1327 = vmatpush1.bf16.msra.mxu0 %v1314
        %1328 = vmatprep.subr.bf16.mxu0 0
        %1329 = vmatpush1.bf16.msra.mxu0 %v1315
        %1330 = vmatprep.subr.bf16.mxu0 0
        %1331 = vmatpush1.bf16.msra.mxu0 %v1316
        %1332 = vmatprep.subr.bf16.mxu0 0
        %1333 = vmatpush1.bf16.msra.mxu0 0
        %1334 = vmatprep.subr.bf16.mxu0 0
        %1335 = vmatpush1.bf16.msra.mxu0 0
        %1336 = vmatprep.subr.bf16.mxu0 0
        %1337 = vmatpush1.bf16.msra.mxu0 0
        %1338 = vmatprep.subr.bf16.mxu0 0
        %1339 = vmatpush1.bf16.msra.mxu0 0
        %1340 = vmatprep.subr.bf16.mxu0 0
        %1341 = vmatpush1.bf16.msra.mxu0 0
        %1342 = vmatprep.subr.bf16.mxu0 0
        %1343 = vmatpush1.bf16.msra.mxu0 0
        %1344 = vmatprep.subr.bf16.mxu0 0
        %1345 = vmatpush1.bf16.msra.mxu0 0
        %1346 = vmatprep.subr.bf16.mxu0 0
        %1347 = vmatpush1.bf16.msra.mxu0 0
        %1348 = vmatprep.subr.bf16.mxu0 0
        %1349 = vmatpush1.bf16.msra.mxu0 0
        %1350 = vmatprep.subr.bf16.mxu0 0
        %1351 = vmatpush1.bf16.msra.mxu0 0
        %1352 = vmatprep.subr.bf16.mxu0 0
        %1353 = vmatpush1.bf16.msra.mxu0 0
        %1354 = vmatprep.subr.bf16.mxu0 0
        %1355 = vmatpush1.bf16.msra.mxu0 0
        %1356 = vmatprep.mubr.bf16.mxu0 0
        %1357 = vmatmul.mubr.bf16.gmra.mrb[0].mxu0 %v1322
        %v1358 = vpop.f32.mrb[0].mxu0
        %v1359 = vadd.f32 %v1295, %v1358
        %v1360 = vpop.f32.mrb[0].mxu0
        %v1361 = vpop.f32.mrb[0].mxu0
        %v1362 = vpop.f32.mrb[0].mxu0
        %1363 = vdwg.mxu0
        %1364 = vst.msk [vmem:[%s299] sm:$0xff] %vm371, %v1359
        %s1365 = sand.u32 %s146, 1
        %s1366 = scalar_lea.sflag [#allocation5], %s1365
        %s1367 = sand.u32 %s146, 1
        %s1368 = smul.addr %s1367, 8
        %s1369 = scalar_lea.vmem [#allocation9], %s1368
        %s1370 = sand.u32 %s172, 1
        %s1371 = scalar_lea.sflag [#allocation11], %s1370
        %s1372 = sand.u32 %s172, 1
        %s1373 = scalar_lea.vmem [#allocation10], %s1372
        // Predicated region
        $region53: #{tpu_custom_call.1} parent=39 // pred_check
          %p1374 = pneg %p156
        $region54: #{tpu_custom_call.1} parent=39 // pred_check_branch
          %1376 = sbr.rel (%p1374) target = $region56
        $region55: #{tpu_custom_call.1} parent=39 // pred_region
          %s1378 = ssub.s32 128, 128
          %1379 = vsyncadd %s1366, %s1378
          %s1380 = smul.addr %s28, 128
          %s1381 = scalar_lea.hbm %s5, %s1380
          %s1383 = sshll.u32 %s1369, 4
          %s1384 = int_to_ptr.vmem [resolvable:$true] %s1383
          %1386 = dma.vmem_to_hbm [thread:$0]  %s1384, 128, %s1381, %s1366
        $region56: #{tpu_custom_call.1} parent=39 // pred_fallthru
          _
        // Predicated region
        $region57: #{tpu_custom_call.1} parent=39 // pred_check
          %p1387 = pneg %p182
        $region58: #{tpu_custom_call.1} parent=39 // pred_check_branch
          %1389 = sbr.rel (%p1387) target = $region60
        $region59: #{tpu_custom_call.1} parent=39 // pred_region
          %s1391 = ssub.s32 16, 16
          %1392 = vsyncadd %s1371, %s1391
          %s1393 = smul.addr %s28, 16
          %s1394 = scalar_lea.hbm %s6, %s1393
          %s1396 = sshll.u32 %s1373, 4
          %s1397 = int_to_ptr.vmem [resolvable:$true] %s1396
          %1399 = dma.vmem_to_hbm [thread:$0]  %s1397, 16, %s1394, %s1371
        $region60: #{tpu_custom_call.1} parent=39 // pred_fallthru
          _
      $region40: #{tpu_custom_call.1} parent=5 // pred_fallthru
        _
      %p1400 = scmp.le.s32.totalorder 2, %s23
      // Predicated region
      $region61: #{tpu_custom_call.1} parent=5 // pred_check
        %p1401 = pneg %p1400
      $region62: #{tpu_custom_call.1} parent=5 // pred_check_branch
        %1403 = sbr.rel (%p1401) target = $region64
      $region63: #{tpu_custom_call.1} parent=5 // pred_region
        %s1404 = ssub.s32 %s23, 2
        // Predicated region
        $region65: #{tpu_custom_call.1} parent=63 // pred_check
          %p1405 = pneg %p162
        $region66: #{tpu_custom_call.1} parent=63 // pred_check_branch
          %1407 = sbr.rel (%p1405) target = $region68
        $region67: #{tpu_custom_call.1} parent=63 // pred_region
          %s1408 = sand.u32 %s147, 1
          %s1409 = scalar_lea.sflag [#allocation5], %s1408
          %s1410 = sand.u32 %s147, 1
          %s1411 = smul.addr %s1410, 8
          %s1412 = scalar_lea.vmem [#allocation9], %s1411
          %1413 = dma.done %s1409, 128
        $region68: #{tpu_custom_call.1} parent=63 // pred_fallthru
          _
        // Predicated region
        $region69: #{tpu_custom_call.1} parent=63 // pred_check
          %p1414 = pneg %p188
        $region70: #{tpu_custom_call.1} parent=63 // pred_check_branch
          %1416 = sbr.rel (%p1414) target = $region72
        $region71: #{tpu_custom_call.1} parent=63 // pred_region
          %s1417 = sand.u32 %s173, 1
          %s1418 = scalar_lea.sflag [#allocation11], %s1417
          %s1419 = sand.u32 %s173, 1
          %s1420 = scalar_lea.vmem [#allocation10], %s1419
          %1421 = dma.done %s1418, 16
        $region72: #{tpu_custom_call.1} parent=63 // pred_fallthru
          _
      $region64: #{tpu_custom_call.1} parent=5 // pred_fallthru
        _
    $region6: #{tpu_custom_call.1} parent=1 // loop_footer
      %s27 = sadd.s32 1, %s23
    $region7: #{tpu_custom_call.1} parent=1 // loop_footer_branch
      %22 = sbr.rel target = $region3
    $region8: #{tpu_custom_call.1} parent=1 // loop_exit
      _
    %1422 = vsyncpa [#allocation4], 1
    %s1423 = scalar_lea.sflag [#allocation4], 1
    %1424 = vsyncpa %s1423, 1
    %1425 = vsyncpa [#allocation7], 1
    %1426 = vsyncpa [#allocation5], 1
    %s1427 = scalar_lea.sflag [#allocation5], 1
    %1428 = vsyncpa %s1427, 1
    %1429 = vsyncpa [#allocation11], 1
    %s1430 = scalar_lea.sflag [#allocation11], 1
    %1431 = vsyncpa %s1430, 1

</llo_original>
